<compile_context>
chip_gen: v6e
topology: v6e:2x2x1
jax: 0.10.0
libtpu: 0.0.40
codegen_flags: <defaults>
</compile_context>

<pallas_src>
import functools

import jax
import jax.numpy as jnp
import numpy as np
from jax import lax
from jax.experimental import pallas as pl
from jax.experimental.pallas import tpu as pltpu


# ----------------------------- Pallas kernel --------------------------------


def _fused_block_kernel(xin_ref, w1_ref, b1_ref, w2_ref, b2_ref, w3_ref,
                        b3_ref, o_ref, xp2_ref, xp3_ref, *, H, Bstep):
    """Fused 3x(conv3x3 [+BN-scale folded] + bias [+ReLU]) for Bstep batch elems.

    xin_ref : (1, Bstep*(H+2), W*Cin_eff)  vertically zero-padded inputs with
              batch elements stacked along the row (matmul M) axis, (W, C)
              flattened into lanes.
    wN_ref  : (3, K_N, N_N)  block-Toeplitz weights (horizontal padding and BN
              scale folded in), one matrix per kernel row dy.
    bN_ref  : (1, N_N)       per-channel bias tiled over W (lane layout).
    o_ref   : (1, Bstep*H, NOUT)
    xp2_ref, xp3_ref : (Bstep*(H+2), W*C1)  VMEM scratch (padded intermediates).
    """
    f32 = jnp.float32
    Hp = H + 2
    M = Bstep * Hp          # stacked padded rows per grid step
    MV = M - 2              # rows produced by the shift-and-sum over dy

    def conv(read_rows, w_ref, b_ref, relu):
        # out[i] = sum_dy rows[i + dy] @ w[dy]; three lane-dense MXU matmuls.
        acc = jnp.zeros((MV, w_ref.shape[-1]), f32)
        for dy in range(3):
            acc = acc + jnp.dot(read_rows(dy), w_ref[dy],
                                preferred_element_type=f32)
        out = acc + b_ref[0]
        if relu:
            out = jnp.maximum(out, 0.0)
        return out            # row b*Hp + r is batch b, image row r (r < H)

    def stash(xp_ref, val):
        # Blanket lane-dense store of the combined rows into the padded
        # scratch, then re-zero the per-batch top/bottom padding rows (they
        # either got clobbered by the blanket store or persist across steps).
        xp_ref[1:1 + MV, :] = val
        zrow = jnp.zeros((1, xp_ref.shape[1]), f32)
        for b in range(Bstep):
            xp_ref[b * Hp:b * Hp + 1, :] = zrow
            xp_ref[b * Hp + Hp - 1:b * Hp + Hp, :] = zrow

    # Layer 1: conv3x3(Cin_eff -> C1) + BN + ReLU.
    h1 = conv(lambda dy: xin_ref[0, dy:dy + MV, :], w1_ref, b1_ref, True)
    stash(xp2_ref, h1)

    # Layer 2: conv3x3(C1 -> C1) + BN + ReLU.   K = W*C1 = 128 exactly.
    h2 = conv(lambda dy: xp2_ref[dy:dy + MV, :], w2_ref, b2_ref, True)
    stash(xp3_ref, h2)

    # Layer 3: conv3x3(C1 -> C), bias=False, no BN/ReLU; N padded to 128 lanes.
    h3 = conv(lambda dy: xp3_ref[dy:dy + MV, :], w3_ref, b3_ref, False)
    for b in range(Bstep):
        o_ref[0, b * H:(b + 1) * H, :] = h3[b * Hp:b * Hp + H].astype(o_ref.dtype)


def _grid_steps(B):
    """One grid step per TensorCore when it divides the batch (v7x has 2 TCs
    and dimension_semantics=('parallel',) shards the grid across them);
    otherwise one step with the whole batch folded into the matmul M dimension
    (v5e / v6e have a single TC, so extra grid steps are pure serial per-step
    overhead)."""
    try:
        kind = jax.devices()[0].device_kind.lower()
    except Exception:
        kind = ""
    n_tc = 2 if "v7" in kind else 1
    return n_tc if (n_tc > 1 and B % n_tc == 0) else 1


def fused_interpolate_block(xin, w1, b1, w2, b2, w3, b3, *, H, Bstep, NOUT):
    """xin: (G, Bstep*(H+2), W*Cin_eff) f32 -> (G, Bstep*H, NOUT) f32."""
    G, Mstep, P0 = xin.shape
    N1 = w1.shape[-1]                          # W * C1 (hidden lane width)
    kernel = functools.partial(_fused_block_kernel, H=H, Bstep=Bstep)
    return pl.pallas_call(
        kernel,
        out_shape=jax.ShapeDtypeStruct((G, Bstep * H, NOUT), jnp.float32),
        grid_spec=pltpu.PrefetchScalarGridSpec(
            num_scalar_prefetch=0,
            grid=(G,),
            in_specs=[
                pl.BlockSpec((1, Mstep, P0), lambda g: (g, 0, 0)),
                pl.BlockSpec((3, P0, N1), lambda g: (0, 0, 0)),
                pl.BlockSpec((1, N1), lambda g: (0, 0)),
                pl.BlockSpec((3, N1, N1), lambda g: (0, 0, 0)),
                pl.BlockSpec((1, N1), lambda g: (0, 0)),
                pl.BlockSpec((3, N1, NOUT), lambda g: (0, 0, 0)),
                pl.BlockSpec((1, NOUT), lambda g: (0, 0)),
            ],
            out_specs=pl.BlockSpec((1, Bstep * H, NOUT), lambda g: (g, 0, 0)),
            scratch_shapes=[
                pltpu.VMEM((Mstep, N1), jnp.float32),
                pltpu.VMEM((Mstep, N1), jnp.float32),
            ],
        ),
        compiler_params=pltpu.CompilerParams(
            dimension_semantics=("parallel",)),
    )(xin, w1, b1, w2, b2, w3, b3)


# -------------------- trace-time parameter transformation --------------------


def _block_toeplitz(w_hwio, scale, W, n_pad=None):
    """(3,3,Cin,Cout) HWIO conv weight (+ per-out-channel BN scale folded) ->
    (3, W*Cin, N) block-Toeplitz matrices (one per kernel row dy) with the
    horizontal 'SAME' zero padding folded in (boundary taps truncated).  If
    n_pad is given, the output (lane) dim is zero-padded from W*Cout to n_pad."""
    kh, kw, Cin, Cout = w_hwio.shape
    wf = w_hwio * scale.reshape(1, 1, 1, Cout)
    mats = []
    for dy in range(kh):
        m = jnp.zeros((W, Cin, W, Cout), jnp.float32)
        for dx in range(kw):
            # output column q reads input column q + dx - 1 (taps falling off
            # the image border are dropped == folded zero padding).
            shift = jnp.eye(W, W, k=1 - dx, dtype=jnp.float32)
            m = m + jnp.einsum("pq,io->piqo", shift, wf[dy, dx])
        m = m.reshape(W * Cin, W * Cout)
        if n_pad is not None and n_pad > W * Cout:
            m = jnp.pad(m, ((0, 0), (0, n_pad - W * Cout)))
        mats.append(m)
    return jnp.stack(mats)


def _bias_row(bias, W):
    """(1, Cout) -> (1, W*Cout) bias tiled over the lane-flattened W axis."""
    return jnp.tile(bias, (1, W))


# --------------------------- module forward (glue) ---------------------------


def make_params(in_channels, out_channels, key):
    """Deterministic synthetic parameters matching the PyTorch module shapes."""
    k1, k2, k3 = jax.random.split(key, 3)
    eps = 1e-5

    def conv_w(k, cout, cin):
        # PyTorch layout (Cout, Cin, 3, 3) -> HWIO (3, 3, Cin, Cout)
        w = jax.random.normal(k, (cout, cin, 3, 3), jnp.float32) * 0.1
        return jnp.transpose(w, (2, 3, 1, 0))

    def bn_fold(c, base):
        gamma = 1.0 + 0.1 * jnp.arange(c, dtype=jnp.float32) + base
        beta = 0.01 * jnp.arange(c, dtype=jnp.float32) - base
        running_mean = jnp.zeros((c,), jnp.float32)
        running_var = jnp.ones((c,), jnp.float32)
        scale = gamma / jnp.sqrt(running_var + eps)
        bias = beta - running_mean * scale
        return scale.reshape(1, c), bias.reshape(1, c)

    params = {
        "w1": conv_w(k1, out_channels, in_channels * 3),
        "w2": conv_w(k2, out_channels, out_channels),
        "w3": conv_w(k3, in_channels, out_channels),
    }
    params["s1"], params["b1"] = bn_fold(out_channels, 0.0)
    params["s2"], params["b2"] = bn_fold(out_channels, 0.05)
    params["s3"] = jnp.ones((1, in_channels), jnp.float32)   # no BN on last conv
    params["b3"] = jnp.zeros((1, in_channels), jnp.float32)  # bias=False
    return params


def interpolate_block_forward(x_nchw, params, interpolate=False):
    """Matches InterpolateBlock.forward. x_nchw: (B, C, H, W) -> (B, C, H, W)."""
    B, C, H, W = x_nchw.shape
    x = jnp.transpose(x_nchw, (0, 2, 3, 1))                      # NHWC

    if interpolate:
        x_prev = jnp.concatenate([x[0:1], x[:-1]], axis=0)
        x_after = jnp.concatenate([x[1:], x[-1:]], axis=0)
        inp = jnp.concatenate([x, x_prev, x_after], axis=-1)     # (B, H, W, 3C)
        w1_hwio = params["w1"]
    else:
        # x_prev == x_after == x: fold the 3x channel concat into w1 at trace
        # time (sum the three Cin blocks) and feed x directly.
        inp = x
        kh, kw, cin3, cout = params["w1"].shape
        w1_hwio = params["w1"].reshape(kh, kw, 3, cin3 // 3, cout).sum(axis=2)

    Cin_eff = inp.shape[-1]

    # Vertical zero padding only (horizontal padding is folded into the
    # Toeplitz weights); lane-flatten (W, Cin) and stack the per-step batch
    # slice along the row (M) axis.
    G = _grid_steps(B)
    Bstep = B // G
    xpad = jnp.pad(inp, ((0, 0), (1, 1), (0, 0), (0, 0)))
    xpad = xpad.reshape(G, Bstep * (H + 2), W * Cin_eff)

    # Lane-dense output width (layer-3 channels zero-padded to a 128 multiple).
    NOUT = ((W * C + 127) // 128) * 128

    # Trace-time weight prep: fold BN scale + horizontal padding into
    # block-Toeplitz matmul weights.
    w1 = _block_toeplitz(w1_hwio, params["s1"][0], W)
    w2 = _block_toeplitz(params["w2"], params["s2"][0], W)
    w3 = _block_toeplitz(params["w3"], params["s3"][0], W, n_pad=NOUT)
    b1 = _bias_row(params["b1"], W)
    b2 = _bias_row(params["b2"], W)
    b3 = jnp.pad(_bias_row(params["b3"], W), ((0, 0), (0, NOUT - W * C)))

    out = fused_interpolate_block(xpad, w1, b1, w2, b2, w3, b3,
                                  H=H, Bstep=Bstep, NOUT=NOUT)
    out = out.reshape(B, H, NOUT)[:, :, :W * C].reshape(B, H, W, C)
    return jnp.transpose(out, (0, 3, 1, 2))                      # back to NCHW


# ----------------------------- reference (check) -----------------------------


def _ref_conv(x, w, scale, bias, relu):
    out = lax.conv_general_dilated(
        x, w, window_strides=(1, 1), padding="SAME",
        dimension_numbers=("NHWC", "HWIO", "NHWC"))
    out = out * scale[0] + bias[0]
    if relu:
        out = jnp.maximum(out, 0.0)
    return out


def ref_forward(x_nchw, params, interpolate=False):
    x = jnp.transpose(x_nchw, (0, 2, 3, 1))
    if interpolate:
        x_prev = jnp.concatenate([x[0:1], x[:-1]], axis=0)
        x_after = jnp.concatenate([x[1:], x[-1:]], axis=0)
    else:
        x_prev = x
        x_after = x
    inp = jnp.concatenate([x, x_prev, x_after], axis=-1)
    h = _ref_conv(inp, params["w1"], params["s1"], params["b1"], True)
    h = _ref_conv(h, params["w2"], params["s2"], params["b2"], True)
    out = _ref_conv(h, params["w3"], params["s3"], params["b3"], False)
    return jnp.transpose(out, (0, 3, 1, 2))


# ------------------------------------ main ------------------------------------

if __name__ == "__main__":
    B, C_in, C_out, H, W = 2, 4, 8, 16, 16

    key = jax.random.PRNGKey(0)
    kx, kp = jax.random.split(key)
    x = jax.random.normal(kx, (B, C_in, H, W), jnp.float32)
    params = make_params(C_in, C_out, kp)

    for interp in (False, True):
        out = interpolate_block_forward(x, params, interpolate=interp)
        out = jax.block_until_ready(out)
        ref = jax.block_until_ready(ref_forward(x, params, interpolate=interp))
        assert out.shape == (B, C_in, H, W)
        np.testing.assert_allclose(np.asarray(out), np.asarray(ref),
                                   rtol=1e-4, atol=1e-4)

    print("KERNEL_OK")
</pallas_src>

<mosaic_0001>
module attributes {stable_mosaic.version = 11 : i64} {
  func.func @_fused_block_kernel(%arg0: i32, %arg1: memref<1x36x64xf32, #tpu.memory_space<vmem>>, %arg2: memref<3x64x128xf32, #tpu.memory_space<vmem>>, %arg3: memref<1x128xf32, #tpu.memory_space<vmem>>, %arg4: memref<3x128x128xf32, #tpu.memory_space<vmem>>, %arg5: memref<1x128xf32, #tpu.memory_space<vmem>>, %arg6: memref<3x128x128xf32, #tpu.memory_space<vmem>>, %arg7: memref<1x128xf32, #tpu.memory_space<vmem>>, %arg8: memref<1x32x128xf32, #tpu.memory_space<vmem>>, %arg9: memref<36x128xf32, #tpu.memory_space<vmem>>, %arg10: memref<36x128xf32, #tpu.memory_space<vmem>>) attributes {dimension_semantics = [#tpu.dimension_semantics<parallel>], iteration_bounds = array<i64: 1>, scalar_prefetch = 0 : i64, scratch_operands = 2 : i64, tpu.core_type = #tpu.core_type<tc>, window_params = [{transform_indices = @transform_0, window_bounds = array<i64: 1, 36, 64>}, {pipeline_mode = #tpu.pipeline_mode<synchronous>, transform_indices = @transform_1, window_bounds = array<i64: 3, 64, 128>}, {pipeline_mode = #tpu.pipeline_mode<synchronous>, transform_indices = @transform_2, window_bounds = array<i64: 1, 128>}, {pipeline_mode = #tpu.pipeline_mode<synchronous>, transform_indices = @transform_3, window_bounds = array<i64: 3, 128, 128>}, {pipeline_mode = #tpu.pipeline_mode<synchronous>, transform_indices = @transform_4, window_bounds = array<i64: 1, 128>}, {pipeline_mode = #tpu.pipeline_mode<synchronous>, transform_indices = @transform_5, window_bounds = array<i64: 3, 128, 128>}, {pipeline_mode = #tpu.pipeline_mode<synchronous>, transform_indices = @transform_6, window_bounds = array<i64: 1, 128>}, {transform_indices = @transform_7, window_bounds = array<i64: 1, 32, 128>}]} {
    %cst = arith.constant 0.000000e+00 : f32
    %0 = vector.broadcast %cst : f32 to vector<34x128xf32>
    %c0 = arith.constant 0 : index
    %c0_0 = arith.constant 0 : index
    %c0_1 = arith.constant 0 : index
    %1 = vector.load %arg1[%c0, %c0_0, %c0_1] : memref<1x36x64xf32, #tpu.memory_space<vmem>>, vector<1x34x64xf32>
    %2 = vector.shape_cast %1 : vector<1x34x64xf32> to vector<34x64xf32>
    %c0_2 = arith.constant 0 : index
    %c0_3 = arith.constant 0 : index
    %c0_4 = arith.constant 0 : index
    %3 = vector.load %arg2[%c0_2, %c0_3, %c0_4] : memref<3x64x128xf32, #tpu.memory_space<vmem>>, vector<1x64x128xf32>
    %4 = vector.shape_cast %3 : vector<1x64x128xf32> to vector<64x128xf32>
    %cst_5 = arith.constant dense<0.000000e+00> : vector<34x128xf32>
    %5 = tpu.matmul %2, %4, %cst_5 {dimension_numbers = #tpu.dot_dimension_numbers<[1], [0], [0], [1], [0, 0, 1, 1], [], []>} : vector<34x64xf32>, vector<64x128xf32>, vector<34x128xf32> -> vector<34x128xf32>
    %6 = arith.addf %0, %5 : vector<34x128xf32>
    %c0_6 = arith.constant 0 : index
    %c1 = arith.constant 1 : index
    %c0_7 = arith.constant 0 : index
    %7 = vector.load %arg1[%c0_6, %c1, %c0_7] : memref<1x36x64xf32, #tpu.memory_space<vmem>>, vector<1x34x64xf32>
    %8 = vector.shape_cast %7 : vector<1x34x64xf32> to vector<34x64xf32>
    %c1_8 = arith.constant 1 : index
    %c0_9 = arith.constant 0 : index
    %c0_10 = arith.constant 0 : index
    %9 = vector.load %arg2[%c1_8, %c0_9, %c0_10] : memref<3x64x128xf32, #tpu.memory_space<vmem>>, vector<1x64x128xf32>
    %10 = vector.shape_cast %9 : vector<1x64x128xf32> to vector<64x128xf32>
    %cst_11 = arith.constant dense<0.000000e+00> : vector<34x128xf32>
    %11 = tpu.matmul %8, %10, %cst_11 {dimension_numbers = #tpu.dot_dimension_numbers<[1], [0], [0], [1], [0, 0, 1, 1], [], []>} : vector<34x64xf32>, vector<64x128xf32>, vector<34x128xf32> -> vector<34x128xf32>
    %12 = arith.addf %6, %11 : vector<34x128xf32>
    %c0_12 = arith.constant 0 : index
    %c2 = arith.constant 2 : index
    %c0_13 = arith.constant 0 : index
    %13 = vector.load %arg1[%c0_12, %c2, %c0_13] : memref<1x36x64xf32, #tpu.memory_space<vmem>>, vector<1x34x64xf32>
    %14 = vector.shape_cast %13 : vector<1x34x64xf32> to vector<34x64xf32>
    %c2_14 = arith.constant 2 : index
    %c0_15 = arith.constant 0 : index
    %c0_16 = arith.constant 0 : index
    %15 = vector.load %arg2[%c2_14, %c0_15, %c0_16] : memref<3x64x128xf32, #tpu.memory_space<vmem>>, vector<1x64x128xf32>
    %16 = vector.shape_cast %15 : vector<1x64x128xf32> to vector<64x128xf32>
    %cst_17 = arith.constant dense<0.000000e+00> : vector<34x128xf32>
    %17 = tpu.matmul %14, %16, %cst_17 {dimension_numbers = #tpu.dot_dimension_numbers<[1], [0], [0], [1], [0, 0, 1, 1], [], []>} : vector<34x64xf32>, vector<64x128xf32>, vector<34x128xf32> -> vector<34x128xf32>
    %18 = arith.addf %12, %17 : vector<34x128xf32>
    %c0_18 = arith.constant 0 : index
    %c0_19 = arith.constant 0 : index
    %19 = vector.load %arg3[%c0_18, %c0_19] : memref<1x128xf32, #tpu.memory_space<vmem>>, vector<1x128xf32>
    %20 = vector.shape_cast %19 : vector<1x128xf32> to vector<128xf32>
    %21 = vector.shape_cast %20 : vector<128xf32> to vector<1x128xf32>
    %22 = vector.broadcast %21 : vector<1x128xf32> to vector<34x128xf32>
    %23 = arith.addf %18, %22 : vector<34x128xf32>
    %cst_20 = arith.constant 0.000000e+00 : f32
    %24 = vector.broadcast %cst_20 : f32 to vector<34x128xf32>
    %25 = arith.maximumf %23, %24 : vector<34x128xf32>
    %c1_21 = arith.constant 1 : index
    %c0_22 = arith.constant 0 : index
    %26 = vector.load %arg9[%c1_21, %c0_22] : memref<36x128xf32, #tpu.memory_space<vmem>>, vector<34x128xf32>
    tpu.vector_store %arg9[%c1_21, %c0_22], %25 {strides = array<i32>} : memref<36x128xf32, #tpu.memory_space<vmem>>, vector<34x128xf32>,
    %cst_23 = arith.constant 0.000000e+00 : f32
    %27 = vector.broadcast %cst_23 : f32 to vector<1x128xf32>
    %c0_24 = arith.constant 0 : index
    %c0_25 = arith.constant 0 : index
    %28 = vector.load %arg9[%c0_24, %c0_25] : memref<36x128xf32, #tpu.memory_space<vmem>>, vector<1x128xf32>
    tpu.vector_store %arg9[%c0_24, %c0_25], %27 {strides = array<i32>} : memref<36x128xf32, #tpu.memory_space<vmem>>, vector<1x128xf32>,
    %c17 = arith.constant 17 : index
    %c0_26 = arith.constant 0 : index
    %29 = vector.load %arg9[%c17, %c0_26] : memref<36x128xf32, #tpu.memory_space<vmem>>, vector<1x128xf32>
    tpu.vector_store %arg9[%c17, %c0_26], %27 {strides = array<i32>} : memref<36x128xf32, #tpu.memory_space<vmem>>, vector<1x128xf32>,
    %c18 = arith.constant 18 : index
    %c0_27 = arith.constant 0 : index
    %30 = vector.load %arg9[%c18, %c0_27] : memref<36x128xf32, #tpu.memory_space<vmem>>, vector<1x128xf32>
    tpu.vector_store %arg9[%c18, %c0_27], %27 {strides = array<i32>} : memref<36x128xf32, #tpu.memory_space<vmem>>, vector<1x128xf32>,
    %c35 = arith.constant 35 : index
    %c0_28 = arith.constant 0 : index
    %31 = vector.load %arg9[%c35, %c0_28] : memref<36x128xf32, #tpu.memory_space<vmem>>, vector<1x128xf32>
    tpu.vector_store %arg9[%c35, %c0_28], %27 {strides = array<i32>} : memref<36x128xf32, #tpu.memory_space<vmem>>, vector<1x128xf32>,
    %cst_29 = arith.constant 0.000000e+00 : f32
    %32 = vector.broadcast %cst_29 : f32 to vector<34x128xf32>
    %c0_30 = arith.constant 0 : index
    %c0_31 = arith.constant 0 : index
    %33 = vector.load %arg9[%c0_30, %c0_31] : memref<36x128xf32, #tpu.memory_space<vmem>>, vector<34x128xf32>
    %c0_32 = arith.constant 0 : index
    %c0_33 = arith.constant 0 : index
    %c0_34 = arith.constant 0 : index
    %34 = vector.load %arg4[%c0_32, %c0_33, %c0_34] : memref<3x128x128xf32, #tpu.memory_space<vmem>>, vector<1x128x128xf32>
    %35 = vector.shape_cast %34 : vector<1x128x128xf32> to vector<128x128xf32>
    %cst_35 = arith.constant dense<0.000000e+00> : vector<34x128xf32>
    %36 = tpu.matmul %33, %35, %cst_35 {dimension_numbers = #tpu.dot_dimension_numbers<[1], [0], [0], [1], [0, 0, 1, 1], [], []>} : vector<34x128xf32>, vector<128x128xf32>, vector<34x128xf32> -> vector<34x128xf32>
    %37 = arith.addf %32, %36 : vector<34x128xf32>
    %c1_36 = arith.constant 1 : index
    %c0_37 = arith.constant 0 : index
    %38 = vector.load %arg9[%c1_36, %c0_37] : memref<36x128xf32, #tpu.memory_space<vmem>>, vector<34x128xf32>
    %c1_38 = arith.constant 1 : index
    %c0_39 = arith.constant 0 : index
    %c0_40 = arith.constant 0 : index
    %39 = vector.load %arg4[%c1_38, %c0_39, %c0_40] : memref<3x128x128xf32, #tpu.memory_space<vmem>>, vector<1x128x128xf32>
    %40 = vector.shape_cast %39 : vector<1x128x128xf32> to vector<128x128xf32>
    %cst_41 = arith.constant dense<0.000000e+00> : vector<34x128xf32>
    %41 = tpu.matmul %38, %40, %cst_41 {dimension_numbers = #tpu.dot_dimension_numbers<[1], [0], [0], [1], [0, 0, 1, 1], [], []>} : vector<34x128xf32>, vector<128x128xf32>, vector<34x128xf32> -> vector<34x128xf32>
    %42 = arith.addf %37, %41 : vector<34x128xf32>
    %c2_42 = arith.constant 2 : index
    %c0_43 = arith.constant 0 : index
    %43 = vector.load %arg9[%c2_42, %c0_43] : memref<36x128xf32, #tpu.memory_space<vmem>>, vector<34x128xf32>
    %c2_44 = arith.constant 2 : index
    %c0_45 = arith.constant 0 : index
    %c0_46 = arith.constant 0 : index
    %44 = vector.load %arg4[%c2_44, %c0_45, %c0_46] : memref<3x128x128xf32, #tpu.memory_space<vmem>>, vector<1x128x128xf32>
    %45 = vector.shape_cast %44 : vector<1x128x128xf32> to vector<128x128xf32>
    %cst_47 = arith.constant dense<0.000000e+00> : vector<34x128xf32>
    %46 = tpu.matmul %43, %45, %cst_47 {dimension_numbers = #tpu.dot_dimension_numbers<[1], [0], [0], [1], [0, 0, 1, 1], [], []>} : vector<34x128xf32>, vector<128x128xf32>, vector<34x128xf32> -> vector<34x128xf32>
    %47 = arith.addf %42, %46 : vector<34x128xf32>
    %c0_48 = arith.constant 0 : index
    %c0_49 = arith.constant 0 : index
    %48 = vector.load %arg5[%c0_48, %c0_49] : memref<1x128xf32, #tpu.memory_space<vmem>>, vector<1x128xf32>
    %49 = vector.shape_cast %48 : vector<1x128xf32> to vector<128xf32>
    %50 = vector.shape_cast %49 : vector<128xf32> to vector<1x128xf32>
    %51 = vector.broadcast %50 : vector<1x128xf32> to vector<34x128xf32>
    %52 = arith.addf %47, %51 : vector<34x128xf32>
    %cst_50 = arith.constant 0.000000e+00 : f32
    %53 = vector.broadcast %cst_50 : f32 to vector<34x128xf32>
    %54 = arith.maximumf %52, %53 : vector<34x128xf32>
    %c1_51 = arith.constant 1 : index
    %c0_52 = arith.constant 0 : index
    %55 = vector.load %arg10[%c1_51, %c0_52] : memref<36x128xf32, #tpu.memory_space<vmem>>, vector<34x128xf32>
    tpu.vector_store %arg10[%c1_51, %c0_52], %54 {strides = array<i32>} : memref<36x128xf32, #tpu.memory_space<vmem>>, vector<34x128xf32>,
    %cst_53 = arith.constant 0.000000e+00 : f32
    %56 = vector.broadcast %cst_53 : f32 to vector<1x128xf32>
    %c0_54 = arith.constant 0 : index
    %c0_55 = arith.constant 0 : index
    %57 = vector.load %arg10[%c0_54, %c0_55] : memref<36x128xf32, #tpu.memory_space<vmem>>, vector<1x128xf32>
    tpu.vector_store %arg10[%c0_54, %c0_55], %56 {strides = array<i32>} : memref<36x128xf32, #tpu.memory_space<vmem>>, vector<1x128xf32>,
    %c17_56 = arith.constant 17 : index
    %c0_57 = arith.constant 0 : index
    %58 = vector.load %arg10[%c17_56, %c0_57] : memref<36x128xf32, #tpu.memory_space<vmem>>, vector<1x128xf32>
    tpu.vector_store %arg10[%c17_56, %c0_57], %56 {strides = array<i32>} : memref<36x128xf32, #tpu.memory_space<vmem>>, vector<1x128xf32>,
    %c18_58 = arith.constant 18 : index
    %c0_59 = arith.constant 0 : index
    %59 = vector.load %arg10[%c18_58, %c0_59] : memref<36x128xf32, #tpu.memory_space<vmem>>, vector<1x128xf32>
    tpu.vector_store %arg10[%c18_58, %c0_59], %56 {strides = array<i32>} : memref<36x128xf32, #tpu.memory_space<vmem>>, vector<1x128xf32>,
    %c35_60 = arith.constant 35 : index
    %c0_61 = arith.constant 0 : index
    %60 = vector.load %arg10[%c35_60, %c0_61] : memref<36x128xf32, #tpu.memory_space<vmem>>, vector<1x128xf32>
    tpu.vector_store %arg10[%c35_60, %c0_61], %56 {strides = array<i32>} : memref<36x128xf32, #tpu.memory_space<vmem>>, vector<1x128xf32>,
    %cst_62 = arith.constant 0.000000e+00 : f32
    %61 = vector.broadcast %cst_62 : f32 to vector<34x128xf32>
    %c0_63 = arith.constant 0 : index
    %c0_64 = arith.constant 0 : index
    %62 = vector.load %arg10[%c0_63, %c0_64] : memref<36x128xf32, #tpu.memory_space<vmem>>, vector<34x128xf32>
    %c0_65 = arith.constant 0 : index
    %c0_66 = arith.constant 0 : index
    %c0_67 = arith.constant 0 : index
    %63 = vector.load %arg6[%c0_65, %c0_66, %c0_67] : memref<3x128x128xf32, #tpu.memory_space<vmem>>, vector<1x128x128xf32>
    %64 = vector.shape_cast %63 : vector<1x128x128xf32> to vector<128x128xf32>
    %cst_68 = arith.constant dense<0.000000e+00> : vector<34x128xf32>
    %65 = tpu.matmul %62, %64, %cst_68 {dimension_numbers = #tpu.dot_dimension_numbers<[1], [0], [0], [1], [0, 0, 1, 1], [], []>} : vector<34x128xf32>, vector<128x128xf32>, vector<34x128xf32> -> vector<34x128xf32>
    %66 = arith.addf %61, %65 : vector<34x128xf32>
    %c1_69 = arith.constant 1 : index
    %c0_70 = arith.constant 0 : index
    %67 = vector.load %arg10[%c1_69, %c0_70] : memref<36x128xf32, #tpu.memory_space<vmem>>, vector<34x128xf32>
    %c1_71 = arith.constant 1 : index
    %c0_72 = arith.constant 0 : index
    %c0_73 = arith.constant 0 : index
    %68 = vector.load %arg6[%c1_71, %c0_72, %c0_73] : memref<3x128x128xf32, #tpu.memory_space<vmem>>, vector<1x128x128xf32>
    %69 = vector.shape_cast %68 : vector<1x128x128xf32> to vector<128x128xf32>
    %cst_74 = arith.constant dense<0.000000e+00> : vector<34x128xf32>
    %70 = tpu.matmul %67, %69, %cst_74 {dimension_numbers = #tpu.dot_dimension_numbers<[1], [0], [0], [1], [0, 0, 1, 1], [], []>} : vector<34x128xf32>, vector<128x128xf32>, vector<34x128xf32> -> vector<34x128xf32>
    %71 = arith.addf %66, %70 : vector<34x128xf32>
    %c2_75 = arith.constant 2 : index
    %c0_76 = arith.constant 0 : index
    %72 = vector.load %arg10[%c2_75, %c0_76] : memref<36x128xf32, #tpu.memory_space<vmem>>, vector<34x128xf32>
    %c2_77 = arith.constant 2 : index
    %c0_78 = arith.constant 0 : index
    %c0_79 = arith.constant 0 : index
    %73 = vector.load %arg6[%c2_77, %c0_78, %c0_79] : memref<3x128x128xf32, #tpu.memory_space<vmem>>, vector<1x128x128xf32>
    %74 = vector.shape_cast %73 : vector<1x128x128xf32> to vector<128x128xf32>
    %cst_80 = arith.constant dense<0.000000e+00> : vector<34x128xf32>
    %75 = tpu.matmul %72, %74, %cst_80 {dimension_numbers = #tpu.dot_dimension_numbers<[1], [0], [0], [1], [0, 0, 1, 1], [], []>} : vector<34x128xf32>, vector<128x128xf32>, vector<34x128xf32> -> vector<34x128xf32>
    %76 = arith.addf %71, %75 : vector<34x128xf32>
    %c0_81 = arith.constant 0 : index
    %c0_82 = arith.constant 0 : index
    %77 = vector.load %arg7[%c0_81, %c0_82] : memref<1x128xf32, #tpu.memory_space<vmem>>, vector<1x128xf32>
    %78 = vector.shape_cast %77 : vector<1x128xf32> to vector<128xf32>
    %79 = vector.shape_cast %78 : vector<128xf32> to vector<1x128xf32>
    %80 = vector.broadcast %79 : vector<1x128xf32> to vector<34x128xf32>
    %81 = arith.addf %76, %80 : vector<34x128xf32>
    %82 = vector.extract_strided_slice %81 {offsets = [0, 0], sizes = [16, 128], strides = [1, 1]} : vector<34x128xf32> to vector<16x128xf32>
    %c0_83 = arith.constant 0 : index
    %c0_84 = arith.constant 0 : index
    %c0_85 = arith.constant 0 : index
    %83 = vector.load %arg8[%c0_83, %c0_84, %c0_85] : memref<1x32x128xf32, #tpu.memory_space<vmem>>, vector<1x16x128xf32>
    %84 = vector.shape_cast %83 : vector<1x16x128xf32> to vector<16x128xf32>
    %85 = vector.shape_cast %82 : vector<16x128xf32> to vector<1x16x128xf32>
    tpu.vector_store %arg8[%c0_83, %c0_84, %c0_85], %85 {strides = array<i32>} : memref<1x32x128xf32, #tpu.memory_space<vmem>>, vector<1x16x128xf32>,
    %86 = vector.extract_strided_slice %81 {offsets = [18, 0], sizes = [16, 128], strides = [1, 1]} : vector<34x128xf32> to vector<16x128xf32>
    %c0_86 = arith.constant 0 : index
    %c16 = arith.constant 16 : index
    %c0_87 = arith.constant 0 : index
    %87 = vector.load %arg8[%c0_86, %c16, %c0_87] : memref<1x32x128xf32, #tpu.memory_space<vmem>>, vector<1x16x128xf32>
    %88 = vector.shape_cast %87 : vector<1x16x128xf32> to vector<16x128xf32>
    %89 = vector.shape_cast %86 : vector<16x128xf32> to vector<1x16x128xf32>
    tpu.vector_store %arg8[%c0_86, %c16, %c0_87], %89 {strides = array<i32>} : memref<1x32x128xf32, #tpu.memory_space<vmem>>, vector<1x16x128xf32>,
    return
  }
  func.func @transform_0(%arg0: i32) -> (i32, i32, i32) {
    %c0_i32 = arith.constant 0 : i32
    %c0_i32_0 = arith.constant 0 : i32
    %c0_i32_1 = arith.constant 0 : i32
    return %arg0, %c0_i32, %c0_i32_0 : i32, i32, i32
  }
  func.func @transform_1(%arg0: i32) -> (i32, i32, i32) {
    %c0_i32 = arith.constant 0 : i32
    %c0_i32_0 = arith.constant 0 : i32
    %c0_i32_1 = arith.constant 0 : i32
    %c0_i32_2 = arith.constant 0 : i32
    return %c0_i32, %c0_i32_0, %c0_i32_1 : i32, i32, i32
  }
  func.func @transform_2(%arg0: i32) -> (i32, i32) {
    %c0_i32 = arith.constant 0 : i32
    %c0_i32_0 = arith.constant 0 : i32
    %c0_i32_1 = arith.constant 0 : i32
    return %c0_i32, %c0_i32_0 : i32, i32
  }
  func.func @transform_3(%arg0: i32) -> (i32, i32, i32) {
    %c0_i32 = arith.constant 0 : i32
    %c0_i32_0 = arith.constant 0 : i32
    %c0_i32_1 = arith.constant 0 : i32
    %c0_i32_2 = arith.constant 0 : i32
    return %c0_i32, %c0_i32_0, %c0_i32_1 : i32, i32, i32
  }
  func.func @transform_4(%arg0: i32) -> (i32, i32) {
    %c0_i32 = arith.constant 0 : i32
    %c0_i32_0 = arith.constant 0 : i32
    %c0_i32_1 = arith.constant 0 : i32
    return %c0_i32, %c0_i32_0 : i32, i32
  }
  func.func @transform_5(%arg0: i32) -> (i32, i32, i32) {
    %c0_i32 = arith.constant 0 : i32
    %c0_i32_0 = arith.constant 0 : i32
    %c0_i32_1 = arith.constant 0 : i32
    %c0_i32_2 = arith.constant 0 : i32
    return %c0_i32, %c0_i32_0, %c0_i32_1 : i32, i32, i32
  }
  func.func @transform_6(%arg0: i32) -> (i32, i32) {
    %c0_i32 = arith.constant 0 : i32
    %c0_i32_0 = arith.constant 0 : i32
    %c0_i32_1 = arith.constant 0 : i32
    return %c0_i32, %c0_i32_0 : i32, i32
  }
  func.func @transform_7(%arg0: i32) -> (i32, i32, i32) {
    %c0_i32 = arith.constant 0 : i32
    %c0_i32_0 = arith.constant 0 : i32
    %c0_i32_1 = arith.constant 0 : i32
    return %arg0, %c0_i32, %c0_i32_0 : i32, i32, i32
  }
}

</mosaic_0001>

<llo_original>
// kernel: tpu_custom_call.1
$region0: #{tpu_custom_call.1}
  #allocation0 [shape = 'u32[]', space=smem, size = 0x4, offset = 0x4, fixed_abs, tag = 'smem constant byte address 0x4 - core index']
  #allocation1 [shape = 'u32[144,128]{1,0:T(1,128)}', space=vmem, size = 0x12000, scoped, tag = 'internal scratch']
  #allocation2 [shape = 'f32[36,128]{1,0:T(8,128)}', space=vmem, size = 0x5000, scoped, tag = 'scratch operand']
  #allocation3 [shape = 'f32[36,128]{1,0:T(8,128)}', space=vmem, size = 0x5000, scoped, tag = 'scratch operand']
  %s0 = inlined_call_operand.vmem [shape: f32[1,36,64], index: 0, kind: input, shape index: {}]
  %s1 = inlined_call_operand.hbm [shape: f32[3,64,128], index: 1, kind: input, shape index: {}]
  %s2 = inlined_call_operand.vmem [shape: f32[1,128], index: 2, kind: input, shape index: {}]
  %s3 = inlined_call_operand.hbm [shape: f32[3,128,128], index: 3, kind: input, shape index: {}]
  %s4 = inlined_call_operand.vmem [shape: f32[1,128], index: 4, kind: input, shape index: {}]
  %s5 = inlined_call_operand.hbm [shape: f32[3,128,128], index: 5, kind: input, shape index: {}]
  %s6 = inlined_call_operand.vmem [shape: f32[1,128], index: 6, kind: input, shape index: {}]
  %s7 = inlined_call_operand.hbm [shape: f32[1,32,128], index: 7, kind: output, shape index: {}]
  %s8 = sld [smem:[#allocation0]]
  $region50: #{tpu_custom_call.1} parent=0
    _
  %s10 = ssub.s32 1, %s8
  %s11 = scalar_select 0, %s10, %s8
  $region1: #{tpu_custom_call.1} parent=0
    #allocation4 [shape = 'u8[98304]{0}', space=vmem, size = 0x18000, scoped, tag = 'input window, operand 1, single buffered']
    #allocation5 [shape = 's32[1]{0}', space=sflag, size = 0x4, scoped, tag = 'scoped memory for tpu_custom_call.1']
    #allocation6 [shape = 's32[1]{0}', space=sflag, size = 0x4, scoped, tag = 'scoped memory for tpu_custom_call.1']
    #allocation7 [shape = 'u8[196608]{0}', space=vmem, size = 0x30000, scoped, tag = 'input window, operand 3, single buffered']
    #allocation8 [shape = 's32[1]{0}', space=sflag, size = 0x4, scoped, tag = 'scoped memory for tpu_custom_call.1']
    #allocation9 [shape = 'u8[196608]{0}', space=vmem, size = 0x30000, scoped, tag = 'input window, operand 5, single buffered']
    #allocation10 [shape = 'u8[16384]{0}', space=vmem, size = 0x4000, scoped, tag = 'output window, operand 0, single buffered']
    %12 = vsyncpa [#allocation5], 0
    %13 = vsyncpa [#allocation8], 0
    %14 = vsyncpa [#allocation6], 0
    // Predicated region
    $region2: #{tpu_custom_call.1} parent=1 // pred_check
      _
    $region3: #{tpu_custom_call.1} parent=1 // pred_check_branch
      %16 = sbr.rel (0) target = $region5
    $region4: #{tpu_custom_call.1} parent=1 // pred_region
      _
    $region5: #{tpu_custom_call.1} parent=1 // pred_fallthru
      _
    // Predicated region
    $region6: #{tpu_custom_call.1} parent=1 // pred_check
      _
    $region7: #{tpu_custom_call.1} parent=1 // pred_check_branch
      %18 = sbr.rel (0) target = $region9
    $region8: #{tpu_custom_call.1} parent=1 // pred_region
      %s20 = ssub.s32 3072, 3072
      %21 = vsyncadd [#allocation5], %s20
      %s22 = sshll.u32 [#allocation4], 4
      %s23 = int_to_ptr.vmem [resolvable:$true] %s22
      %28 = dma.hbm_to_vmem [thread:$0]  %s1, 3072, %s23, [#allocation5], 128, 128, 8
    $region9: #{tpu_custom_call.1} parent=1 // pred_fallthru
      _
    // Predicated region
    $region10: #{tpu_custom_call.1} parent=1 // pred_check
      _
    $region11: #{tpu_custom_call.1} parent=1 // pred_check_branch
      %30 = sbr.rel (0) target = $region13
    $region12: #{tpu_custom_call.1} parent=1 // pred_region
      _
    $region13: #{tpu_custom_call.1} parent=1 // pred_fallthru
      _
    // Predicated region
    $region14: #{tpu_custom_call.1} parent=1 // pred_check
      _
    $region15: #{tpu_custom_call.1} parent=1 // pred_check_branch
      %32 = sbr.rel (0) target = $region17
    $region16: #{tpu_custom_call.1} parent=1 // pred_region
      %s34 = ssub.s32 6144, 6144
      %35 = vsyncadd [#allocation8], %s34
      %s36 = sshll.u32 [#allocation7], 4
      %s37 = int_to_ptr.vmem [resolvable:$true] %s36
      %42 = dma.hbm_to_vmem [thread:$0]  %s3, 6144, %s37, [#allocation8], 128, 128, 8
    $region17: #{tpu_custom_call.1} parent=1 // pred_fallthru
      _
    // Predicated region
    $region18: #{tpu_custom_call.1} parent=1 // pred_check
      _
    $region19: #{tpu_custom_call.1} parent=1 // pred_check_branch
      %44 = sbr.rel (0) target = $region21
    $region20: #{tpu_custom_call.1} parent=1 // pred_region
      _
    $region21: #{tpu_custom_call.1} parent=1 // pred_fallthru
      _
    // Predicated region
    $region22: #{tpu_custom_call.1} parent=1 // pred_check
      _
    $region23: #{tpu_custom_call.1} parent=1 // pred_check_branch
      %46 = sbr.rel (0) target = $region25
    $region24: #{tpu_custom_call.1} parent=1 // pred_region
      %s48 = ssub.s32 6144, 6144
      %49 = vsyncadd [#allocation8], %s48
      %s50 = sshll.u32 [#allocation9], 4
      %s51 = int_to_ptr.vmem [resolvable:$true] %s50
      %56 = dma.hbm_to_vmem [thread:$0]  %s5, 6144, %s51, [#allocation8], 128, 128, 8
    $region25: #{tpu_custom_call.1} parent=1 // pred_fallthru
      _
    // Predicated region
    $region26: #{tpu_custom_call.1} parent=1 // pred_check
      _
    $region27: #{tpu_custom_call.1} parent=1 // pred_check_branch
      %58 = sbr.rel (0) target = $region29
    $region28: #{tpu_custom_call.1} parent=1 // pred_region
      _
    $region29: #{tpu_custom_call.1} parent=1 // pred_fallthru
      _
    // Predicated region
    $region30: #{tpu_custom_call.1} parent=1 // pred_check
      _
    $region31: #{tpu_custom_call.1} parent=1 // pred_check_branch
      %60 = sbr.rel (0) target = $region33
    $region32: #{tpu_custom_call.1} parent=1 // pred_region
      %61 = dma.done [#allocation5], 3072
    $region33: #{tpu_custom_call.1} parent=1 // pred_fallthru
      _
    // Predicated region
    $region34: #{tpu_custom_call.1} parent=1 // pred_check
      _
    $region35: #{tpu_custom_call.1} parent=1 // pred_check_branch
      %63 = sbr.rel (0) target = $region37
    $region36: #{tpu_custom_call.1} parent=1 // pred_region
      %64 = dma.done [#allocation8], 6144
    $region37: #{tpu_custom_call.1} parent=1 // pred_fallthru
      _
    // Predicated region
    $region38: #{tpu_custom_call.1} parent=1 // pred_check
      _
    $region39: #{tpu_custom_call.1} parent=1 // pred_check_branch
      %66 = sbr.rel (0) target = $region41
    $region40: #{tpu_custom_call.1} parent=1 // pred_region
      %67 = dma.done [#allocation8], 6144
    $region41: #{tpu_custom_call.1} parent=1 // pred_fallthru
      _
    %v68 = vld [vmem:[%s0] sm:$0xff]
    %v69 = vld [vmem:[%s0 + $0x8] sm:$0xff]
    %v70 = vld [vmem:[%s0 + $0x10] sm:$0xff]
    %v71 = vld [vmem:[%s0 + $0x18] sm:$0xff]
    %v72 = vld [vmem:[%s0 + $0x20] sm:$0x3]
    %v73 = vld [vmem:[#allocation4] sm:$0xff]
    %v74 = vld [vmem:[#allocation4 + $0x8] sm:$0xff]
    %v75 = vld [vmem:[#allocation4 + $0x10] sm:$0xff]
    %v76 = vld [vmem:[#allocation4 + $0x18] sm:$0xff]
    %v77 = vld [vmem:[#allocation4 + $0x20] sm:$0xff]
    %v78 = vld [vmem:[#allocation4 + $0x28] sm:$0xff]
    %v79 = vld [vmem:[#allocation4 + $0x30] sm:$0xff]
    %v80 = vld [vmem:[#allocation4 + $0x38] sm:$0xff]
    %v81 = vld [vmem:[%s0 + $0x1] sm:$0xff]
    %v82 = vld [vmem:[%s0 + $0x9] sm:$0xff]
    %v83 = vld [vmem:[%s0 + $0x11] sm:$0xff]
    %v84 = vld [vmem:[%s0 + $0x19] sm:$0xff]
    %v85 = vld [vmem:[%s0 + $0x21] sm:$0x3]
    %s86 = scalar_lea.vmem [#allocation4], 64
    %v87 = vld [vmem:[%s86] sm:$0xff]
    %v88 = vld [vmem:[%s86 + $0x8] sm:$0xff]
    %v89 = vld [vmem:[%s86 + $0x10] sm:$0xff]
    %v90 = vld [vmem:[%s86 + $0x18] sm:$0xff]
    %v91 = vld [vmem:[%s86 + $0x20] sm:$0xff]
    %v92 = vld [vmem:[%s86 + $0x28] sm:$0xff]
    %v93 = vld [vmem:[%s86 + $0x30] sm:$0xff]
    %v94 = vld [vmem:[%s86 + $0x38] sm:$0xff]
    %vm95 = vcmask 523264
    %v97 = vsel %vm95, %v81, 0
    %v100 = vsel %vm95, %v82, 0
    %v103 = vsel %vm95, %v83, 0
    %v106 = vsel %vm95, %v84, 0
    %v109 = vsel %vm95, %v85, 0
    %111 = vmatprep.subr.mxu0 0.0
    %112 = vmatpush1.msra.mxu0 0.0
    %113 = vmatprep.subr.mxu0 0.0
    %114 = vmatpush1.msra.mxu0 0.0
    %115 = vmatprep.subr.mxu0 0.0
    %116 = vmatpush1.msra.mxu0 0.0
    %117 = vmatprep.subr.mxu0 0.0
    %118 = vmatpush1.msra.mxu0 0.0
    %119 = vmatprep.subr.mxu0 0.0
    %120 = vmatpush1.msra.mxu0 0.0
    %121 = vmatprep.subr.mxu0 0.0
    %122 = vmatpush1.msra.mxu0 0.0
    %123 = vmatprep.subr.mxu0 0.0
    %124 = vmatpush1.msra.mxu0 0.0
    %125 = vmatprep.subr.mxu0 0.0
    %126 = vmatpush1.msra.mxu0 0.0
    %127 = vmatprep.subr.mxu0 0.0
    %128 = vmatpush1.msra.mxu0 %v94
    %129 = vmatprep.subr.mxu0 0.0
    %130 = vmatpush1.msra.mxu0 %v93
    %131 = vmatprep.subr.mxu0 0.0
    %132 = vmatpush1.msra.mxu0 %v92
    %133 = vmatprep.subr.mxu0 0.0
    %134 = vmatpush1.msra.mxu0 %v91
    %135 = vmatprep.subr.mxu0 0.0
    %136 = vmatpush1.msra.mxu0 %v90
    %137 = vmatprep.subr.mxu0 0.0
    %138 = vmatpush1.msra.mxu0 %v89
    %139 = vmatprep.subr.mxu0 0.0
    %140 = vmatpush1.msra.mxu0 %v88
    %141 = vmatprep.subr.mxu0 0.0
    %142 = vmatpush1.msra.mxu0 %v87
    %143 = vmatprep.subr.mxu0 0.0
    %144 = vmatpush2.msra.mxu0 0.0
    %145 = vmatprep.subr.mxu0 0.0
    %146 = vmatpush2.msra.mxu0 0.0
    %147 = vmatprep.subr.mxu0 0.0
    %148 = vmatpush2.msra.mxu0 0.0
    %149 = vmatprep.subr.mxu0 0.0
    %150 = vmatpush2.msra.mxu0 0.0
    %151 = vmatprep.subr.mxu0 0.0
    %152 = vmatpush2.msra.mxu0 0.0
    %153 = vmatprep.subr.mxu0 0.0
    %154 = vmatpush2.msra.mxu0 0.0
    %155 = vmatprep.subr.mxu0 0.0
    %156 = vmatpush2.msra.mxu0 0.0
    %157 = vmatprep.subr.mxu0 0.0
    %158 = vmatpush2.msra.mxu0 0.0
    %159 = vmatprep.subr.mxu0 0.0
    %160 = vmatpush2.msra.mxu0 0.0
    %161 = vmatprep.subr.mxu0 0.0
    %162 = vmatpush2.msra.mxu0 0.0
    %163 = vmatprep.subr.mxu0 0.0
    %164 = vmatpush2.msra.mxu0 0.0
    %165 = vmatprep.subr.mxu0 0.0
    %166 = vmatpush2.msra.mxu0 0.0
    %167 = vmatprep.subr.mxu0 0.0
    %168 = vmatpush2.msra.mxu0 0.0
    %169 = vmatprep.subr.mxu0 0.0
    %170 = vmatpush2.msra.mxu0 0.0
    %171 = vmatprep.subr.mxu0 0.0
    %172 = vmatpush2.msra.mxu0 0.0
    %173 = vmatprep.subr.mxu0 0.0
    %174 = vmatpush2.msra.mxu0 0.0
    %175 = vmatprep.mubr.f32.mxu0 0.0
    %176 = vmatmul.mubr.f32.gmra.mxu0 %v97
    %v177 = vpop.f32.mrf.mxu0
    %v178 = vadd.f32 0.0, %v177
    %v179 = vpop.f32.mrf.mxu0
    %180 = vmatprep.mubr.f32.mxu0 0.0
    %181 = vmatmul.mubr.f32.gmra.mxu0 %v100
    %v182 = vpop.f32.mrf.mxu0
    %v183 = vadd.f32 0.0, %v182
    %v184 = vpop.f32.mrf.mxu0
    %185 = vmatprep.mubr.f32.mxu0 0.0
    %186 = vmatmul.mubr.f32.gmra.mxu0 %v103
    %v187 = vpop.f32.mrf.mxu0
    %v188 = vadd.f32 0.0, %v187
    %v189 = vpop.f32.mrf.mxu0
    %190 = vmatprep.mubr.f32.mxu0 0.0
    %191 = vmatmul.mubr.f32.gmra.mxu0 %v106
    %v192 = vpop.f32.mrf.mxu0
    %v193 = vadd.f32 0.0, %v192
    %v194 = vpop.f32.mrf.mxu0
    %195 = vmatprep.mubr.f32.mxu0 0.0
    %196 = vmatmul.mubr.f32.gmra.mxu0 %v109
    %v197 = vpop.f32.mrf.mxu0
    %v198 = vadd.f32 0.0, %v197
    %v199 = vpop.f32.mrf.mxu0
    %200 = vdwg.mxu0
    %v202 = vsel %vm95, %v68, 0
    %v205 = vsel %vm95, %v69, 0
    %v208 = vsel %vm95, %v70, 0
    %v211 = vsel %vm95, %v71, 0
    %v214 = vsel %vm95, %v72, 0
    %216 = vmatprep.subr.mxu0 0.0
    %217 = vmatpush1.msra.mxu0 0.0
    %218 = vmatprep.subr.mxu0 0.0
    %219 = vmatpush1.msra.mxu0 0.0
    %220 = vmatprep.subr.mxu0 0.0
    %221 = vmatpush1.msra.mxu0 0.0
    %222 = vmatprep.subr.mxu0 0.0
    %223 = vmatpush1.msra.mxu0 0.0
    %224 = vmatprep.subr.mxu0 0.0
    %225 = vmatpush1.msra.mxu0 0.0
    %226 = vmatprep.subr.mxu0 0.0
    %227 = vmatpush1.msra.mxu0 0.0
    %228 = vmatprep.subr.mxu0 0.0
    %229 = vmatpush1.msra.mxu0 0.0
    %230 = vmatprep.subr.mxu0 0.0
    %231 = vmatpush1.msra.mxu0 0.0
    %232 = vmatprep.subr.mxu0 0.0
    %233 = vmatpush1.msra.mxu0 %v80
    %234 = vmatprep.subr.mxu0 0.0
    %235 = vmatpush1.msra.mxu0 %v79
    %236 = vmatprep.subr.mxu0 0.0
    %237 = vmatpush1.msra.mxu0 %v78
    %238 = vmatprep.subr.mxu0 0.0
    %239 = vmatpush1.msra.mxu0 %v77
    %240 = vmatprep.subr.mxu0 0.0
    %241 = vmatpush1.msra.mxu0 %v76
    %242 = vmatprep.subr.mxu0 0.0
    %243 = vmatpush1.msra.mxu0 %v75
    %244 = vmatprep.subr.mxu0 0.0
    %245 = vmatpush1.msra.mxu0 %v74
    %246 = vmatprep.subr.mxu0 0.0
    %247 = vmatpush1.msra.mxu0 %v73
    %248 = vmatprep.subr.mxu0 0.0
    %249 = vmatpush2.msra.mxu0 0.0
    %250 = vmatprep.subr.mxu0 0.0
    %251 = vmatpush2.msra.mxu0 0.0
    %252 = vmatprep.subr.mxu0 0.0
    %253 = vmatpush2.msra.mxu0 0.0
    %254 = vmatprep.subr.mxu0 0.0
    %255 = vmatpush2.msra.mxu0 0.0
    %256 = vmatprep.subr.mxu0 0.0
    %257 = vmatpush2.msra.mxu0 0.0
    %258 = vmatprep.subr.mxu0 0.0
    %259 = vmatpush2.msra.mxu0 0.0
    %260 = vmatprep.subr.mxu0 0.0
    %261 = vmatpush2.msra.mxu0 0.0
    %262 = vmatprep.subr.mxu0 0.0
    %263 = vmatpush2.msra.mxu0 0.0
    %264 = vmatprep.subr.mxu0 0.0
    %265 = vmatpush2.msra.mxu0 0.0
    %266 = vmatprep.subr.mxu0 0.0
    %267 = vmatpush2.msra.mxu0 0.0
    %268 = vmatprep.subr.mxu0 0.0
    %269 = vmatpush2.msra.mxu0 0.0
    %270 = vmatprep.subr.mxu0 0.0
    %271 = vmatpush2.msra.mxu0 0.0
    %272 = vmatprep.subr.mxu0 0.0
    %273 = vmatpush2.msra.mxu0 0.0
    %274 = vmatprep.subr.mxu0 0.0
    %275 = vmatpush2.msra.mxu0 0.0
    %276 = vmatprep.subr.mxu0 0.0
    %277 = vmatpush2.msra.mxu0 0.0
    %278 = vmatprep.subr.mxu0 0.0
    %279 = vmatpush2.msra.mxu0 0.0
    %280 = vmatprep.mubr.f32.mxu0 0.0
    %281 = vmatmul.mubr.f32.gmra.mxu0 %v202
    %v282 = vpop.f32.mrf.mxu0
    %v283 = vadd.f32 %v178, %v282
    %v284 = vpop.f32.mrf.mxu0
    %285 = vmatprep.mubr.f32.mxu0 0.0
    %286 = vmatmul.mubr.f32.gmra.mxu0 %v205
    %v287 = vpop.f32.mrf.mxu0
    %v288 = vadd.f32 %v183, %v287
    %v289 = vpop.f32.mrf.mxu0
    %290 = vmatprep.mubr.f32.mxu0 0.0
    %291 = vmatmul.mubr.f32.gmra.mxu0 %v208
    %v292 = vpop.f32.mrf.mxu0
    %v293 = vadd.f32 %v188, %v292
    %v294 = vpop.f32.mrf.mxu0
    %295 = vmatprep.mubr.f32.mxu0 0.0
    %296 = vmatmul.mubr.f32.gmra.mxu0 %v211
    %v297 = vpop.f32.mrf.mxu0
    %v298 = vadd.f32 %v193, %v297
    %v299 = vpop.f32.mrf.mxu0
    %300 = vmatprep.mubr.f32.mxu0 0.0
    %301 = vmatmul.mubr.f32.gmra.mxu0 %v214
    %v302 = vpop.f32.mrf.mxu0
    %v303 = vadd.f32 %v198, %v302
    %v304 = vpop.f32.mrf.mxu0
    %305 = vdwg.mxu0
    %v306 = vld [vmem:[%s0 + $0x2] sm:$0xff]
    %v307 = vld [vmem:[%s0 + $0xa] sm:$0xff]
    %v308 = vld [vmem:[%s0 + $0x12] sm:$0xff]
    %v309 = vld [vmem:[%s0 + $0x1a] sm:$0xff]
    %v310 = vld [vmem:[%s0 + $0x22] sm:$0x3]
    %s311 = scalar_lea.vmem [#allocation4], 128
    %v312 = vld [vmem:[%s311] sm:$0xff]
    %v313 = vld [vmem:[%s311 + $0x8] sm:$0xff]
    %v314 = vld [vmem:[%s311 + $0x10] sm:$0xff]
    %v315 = vld [vmem:[%s311 + $0x18] sm:$0xff]
    %v316 = vld [vmem:[%s311 + $0x20] sm:$0xff]
    %v317 = vld [vmem:[%s311 + $0x28] sm:$0xff]
    %v318 = vld [vmem:[%s311 + $0x30] sm:$0xff]
    %v319 = vld [vmem:[%s311 + $0x38] sm:$0xff]
    %v321 = vsel %vm95, %v306, 0
    %v324 = vsel %vm95, %v307, 0
    %v327 = vsel %vm95, %v308, 0
    %v330 = vsel %vm95, %v309, 0
    %v333 = vsel %vm95, %v310, 0
    %335 = vmatprep.subr.mxu0 0.0
    %336 = vmatpush1.msra.mxu0 0.0
    %337 = vmatprep.subr.mxu0 0.0
    %338 = vmatpush1.msra.mxu0 0.0
    %339 = vmatprep.subr.mxu0 0.0
    %340 = vmatpush1.msra.mxu0 0.0
    %341 = vmatprep.subr.mxu0 0.0
    %342 = vmatpush1.msra.mxu0 0.0
    %343 = vmatprep.subr.mxu0 0.0
    %344 = vmatpush1.msra.mxu0 0.0
    %345 = vmatprep.subr.mxu0 0.0
    %346 = vmatpush1.msra.mxu0 0.0
    %347 = vmatprep.subr.mxu0 0.0
    %348 = vmatpush1.msra.mxu0 0.0
    %349 = vmatprep.subr.mxu0 0.0
    %350 = vmatpush1.msra.mxu0 0.0
    %351 = vmatprep.subr.mxu0 0.0
    %352 = vmatpush1.msra.mxu0 %v319
    %353 = vmatprep.subr.mxu0 0.0
    %354 = vmatpush1.msra.mxu0 %v318
    %355 = vmatprep.subr.mxu0 0.0
    %356 = vmatpush1.msra.mxu0 %v317
    %357 = vmatprep.subr.mxu0 0.0
    %358 = vmatpush1.msra.mxu0 %v316
    %359 = vmatprep.subr.mxu0 0.0
    %360 = vmatpush1.msra.mxu0 %v315
    %361 = vmatprep.subr.mxu0 0.0
    %362 = vmatpush1.msra.mxu0 %v314
    %363 = vmatprep.subr.mxu0 0.0
    %364 = vmatpush1.msra.mxu0 %v313
    %365 = vmatprep.subr.mxu0 0.0
    %366 = vmatpush1.msra.mxu0 %v312
    %367 = vmatprep.subr.mxu0 0.0
    %368 = vmatpush2.msra.mxu0 0.0
    %369 = vmatprep.subr.mxu0 0.0
    %370 = vmatpush2.msra.mxu0 0.0
    %371 = vmatprep.subr.mxu0 0.0
    %372 = vmatpush2.msra.mxu0 0.0
    %373 = vmatprep.subr.mxu0 0.0
    %374 = vmatpush2.msra.mxu0 0.0
    %375 = vmatprep.subr.mxu0 0.0
    %376 = vmatpush2.msra.mxu0 0.0
    %377 = vmatprep.subr.mxu0 0.0
    %378 = vmatpush2.msra.mxu0 0.0
    %379 = vmatprep.subr.mxu0 0.0
    %380 = vmatpush2.msra.mxu0 0.0
    %381 = vmatprep.subr.mxu0 0.0
    %382 = vmatpush2.msra.mxu0 0.0
    %383 = vmatprep.subr.mxu0 0.0
    %384 = vmatpush2.msra.mxu0 0.0
    %385 = vmatprep.subr.mxu0 0.0
    %386 = vmatpush2.msra.mxu0 0.0
    %387 = vmatprep.subr.mxu0 0.0
    %388 = vmatpush2.msra.mxu0 0.0
    %389 = vmatprep.subr.mxu0 0.0
    %390 = vmatpush2.msra.mxu0 0.0
    %391 = vmatprep.subr.mxu0 0.0
    %392 = vmatpush2.msra.mxu0 0.0
    %393 = vmatprep.subr.mxu0 0.0
    %394 = vmatpush2.msra.mxu0 0.0
    %395 = vmatprep.subr.mxu0 0.0
    %396 = vmatpush2.msra.mxu0 0.0
    %397 = vmatprep.subr.mxu0 0.0
    %398 = vmatpush2.msra.mxu0 0.0
    %399 = vmatprep.mubr.f32.mxu0 0.0
    %400 = vmatmul.mubr.f32.gmra.mxu0 %v321
    %v401 = vpop.f32.mrf.mxu0
    %v402 = vadd.f32 0.0, %v401
    %v403 = vpop.f32.mrf.mxu0
    %404 = vmatprep.mubr.f32.mxu0 0.0
    %405 = vmatmul.mubr.f32.gmra.mxu0 %v324
    %v406 = vpop.f32.mrf.mxu0
    %v407 = vadd.f32 0.0, %v406
    %v408 = vpop.f32.mrf.mxu0
    %409 = vmatprep.mubr.f32.mxu0 0.0
    %410 = vmatmul.mubr.f32.gmra.mxu0 %v327
    %v411 = vpop.f32.mrf.mxu0
    %v412 = vadd.f32 0.0, %v411
    %v413 = vpop.f32.mrf.mxu0
    %414 = vmatprep.mubr.f32.mxu0 0.0
    %415 = vmatmul.mubr.f32.gmra.mxu0 %v330
    %v416 = vpop.f32.mrf.mxu0
    %v417 = vadd.f32 0.0, %v416
    %v418 = vpop.f32.mrf.mxu0
    %419 = vmatprep.mubr.f32.mxu0 0.0
    %420 = vmatmul.mubr.f32.gmra.mxu0 %v333
    %v421 = vpop.f32.mrf.mxu0
    %v422 = vadd.f32 0.0, %v421
    %v423 = vpop.f32.mrf.mxu0
    %424 = vdwg.mxu0
    %v425 = vadd.f32 %v283, %v402
    %v426 = vadd.f32 %v288, %v407
    %v427 = vadd.f32 %v293, %v412
    %v428 = vadd.f32 %v298, %v417
    %v429 = vadd.f32 %v303, %v422
    %v430 = vld [vmem:[%s2] sm:$0x1]
    %v432 = vlaneseq
    %v433 = vshrl.u32 %v432, 7
    %v434 = vsub.s32 0, %v433
    %v435 = vrot.slane %v430, %v434
    %v437 = vadd.f32 %v425, %v435
    %v438 = vadd.f32 %v426, %v435
    %v439 = vadd.f32 %v427, %v435
    %v440 = vadd.f32 %v428, %v435
    %v441 = vadd.f32 %v429, %v435
    %v442 = vmax.f32 %v437, 0.0
    %v443 = vmax.f32 %v438, 0.0
    %v444 = vmax.f32 %v439, 0.0
    %v445 = vmax.f32 %v440, 0.0
    %v446 = vmax.f32 %v441, 0.0
    %447 = vst [vmem:[#allocation2 + $0x1] sm:$0xff] %v442
    %448 = vst [vmem:[#allocation2 + $0x9] sm:$0xff] %v443
    %449 = vst [vmem:[#allocation2 + $0x11] sm:$0xff] %v444
    %450 = vst [vmem:[#allocation2 + $0x19] sm:$0xff] %v445
    %451 = vst [vmem:[#allocation2 + $0x21] sm:$0x3] %v446
    %452 = vst [vmem:[#allocation2] sm:$0x1] 0.0
    %453 = vst [vmem:[#allocation2 + $0x11] sm:$0x1] 0.0
    %454 = vst [vmem:[#allocation2 + $0x12] sm:$0x1] 0.0
    %455 = vst [vmem:[#allocation2 + $0x23] sm:$0x1] 0.0
    %v456 = vld [vmem:[#allocation2] sm:$0xff]
    %v457 = vld [vmem:[#allocation2 + $0x8] sm:$0xff]
    %v458 = vld [vmem:[#allocation2 + $0x10] sm:$0xff]
    %v459 = vld [vmem:[#allocation2 + $0x18] sm:$0xff]
    %v460 = vld [vmem:[#allocation2 + $0x20] sm:$0x3]
    %v461 = vld [vmem:[#allocation7] sm:$0xff]
    %v462 = vld [vmem:[#allocation7 + $0x8] sm:$0xff]
    %v463 = vld [vmem:[#allocation7 + $0x10] sm:$0xff]
    %v464 = vld [vmem:[#allocation7 + $0x18] sm:$0xff]
    %v465 = vld [vmem:[#allocation7 + $0x20] sm:$0xff]
    %v466 = vld [vmem:[#allocation7 + $0x28] sm:$0xff]
    %v467 = vld [vmem:[#allocation7 + $0x30] sm:$0xff]
    %v468 = vld [vmem:[#allocation7 + $0x38] sm:$0xff]
    %v469 = vld [vmem:[#allocation7 + $0x40] sm:$0xff]
    %v470 = vld [vmem:[#allocation7 + $0x48] sm:$0xff]
    %v471 = vld [vmem:[#allocation7 + $0x50] sm:$0xff]
    %v472 = vld [vmem:[#allocation7 + $0x58] sm:$0xff]
    %v473 = vld [vmem:[#allocation7 + $0x60] sm:$0xff]
    %v474 = vld [vmem:[#allocation7 + $0x68] sm:$0xff]
    %v475 = vld [vmem:[#allocation7 + $0x70] sm:$0xff]
    %v476 = vld [vmem:[#allocation7 + $0x78] sm:$0xff]
    %v477 = vld [vmem:[#allocation2 + $0x1] sm:$0xff]
    %v478 = vld [vmem:[#allocation2 + $0x9] sm:$0xff]
    %v479 = vld [vmem:[#allocation2 + $0x11] sm:$0xff]
    %v480 = vld [vmem:[#allocation2 + $0x19] sm:$0xff]
    %v481 = vld [vmem:[#allocation2 + $0x21] sm:$0x3]
    %s482 = scalar_lea.vmem [#allocation7], 128
    %v483 = vld [vmem:[%s482] sm:$0xff]
    %v484 = vld [vmem:[%s482 + $0x8] sm:$0xff]
    %v485 = vld [vmem:[%s482 + $0x10] sm:$0xff]
    %v486 = vld [vmem:[%s482 + $0x18] sm:$0xff]
    %v487 = vld [vmem:[%s482 + $0x20] sm:$0xff]
    %v488 = vld [vmem:[%s482 + $0x28] sm:$0xff]
    %v489 = vld [vmem:[%s482 + $0x30] sm:$0xff]
    %v490 = vld [vmem:[%s482 + $0x38] sm:$0xff]
    %v491 = vld [vmem:[%s482 + $0x40] sm:$0xff]
    %v492 = vld [vmem:[%s482 + $0x48] sm:$0xff]
    %v493 = vld [vmem:[%s482 + $0x50] sm:$0xff]
    %v494 = vld [vmem:[%s482 + $0x58] sm:$0xff]
    %v495 = vld [vmem:[%s482 + $0x60] sm:$0xff]
    %v496 = vld [vmem:[%s482 + $0x68] sm:$0xff]
    %v497 = vld [vmem:[%s482 + $0x70] sm:$0xff]
    %v498 = vld [vmem:[%s482 + $0x78] sm:$0xff]
    %499 = vmatprep.subr.mxu0 0.0
    %500 = vmatpush1.msra.mxu0 %v498
    %501 = vmatprep.subr.mxu0 0.0
    %502 = vmatpush1.msra.mxu0 %v497
    %503 = vmatprep.subr.mxu0 0.0
    %504 = vmatpush1.msra.mxu0 %v496
    %505 = vmatprep.subr.mxu0 0.0
    %506 = vmatpush1.msra.mxu0 %v495
    %507 = vmatprep.subr.mxu0 0.0
    %508 = vmatpush1.msra.mxu0 %v494
    %509 = vmatprep.subr.mxu0 0.0
    %510 = vmatpush1.msra.mxu0 %v493
    %511 = vmatprep.subr.mxu0 0.0
    %512 = vmatpush1.msra.mxu0 %v492
    %513 = vmatprep.subr.mxu0 0.0
    %514 = vmatpush1.msra.mxu0 %v491
    %515 = vmatprep.subr.mxu0 0.0
    %516 = vmatpush1.msra.mxu0 %v490
    %517 = vmatprep.subr.mxu0 0.0
    %518 = vmatpush1.msra.mxu0 %v489
    %519 = vmatprep.subr.mxu0 0.0
    %520 = vmatpush1.msra.mxu0 %v488
    %521 = vmatprep.subr.mxu0 0.0
    %522 = vmatpush1.msra.mxu0 %v487
    %523 = vmatprep.subr.mxu0 0.0
    %524 = vmatpush1.msra.mxu0 %v486
    %525 = vmatprep.subr.mxu0 0.0
    %526 = vmatpush1.msra.mxu0 %v485
    %527 = vmatprep.subr.mxu0 0.0
    %528 = vmatpush1.msra.mxu0 %v484
    %529 = vmatprep.subr.mxu0 0.0
    %530 = vmatpush1.msra.mxu0 %v483
    %531 = vmatprep.subr.mxu0 0.0
    %532 = vmatpush2.msra.mxu0 0.0
    %533 = vmatprep.subr.mxu0 0.0
    %534 = vmatpush2.msra.mxu0 0.0
    %535 = vmatprep.subr.mxu0 0.0
    %536 = vmatpush2.msra.mxu0 0.0
    %537 = vmatprep.subr.mxu0 0.0
    %538 = vmatpush2.msra.mxu0 0.0
    %539 = vmatprep.subr.mxu0 0.0
    %540 = vmatpush2.msra.mxu0 0.0
    %541 = vmatprep.subr.mxu0 0.0
    %542 = vmatpush2.msra.mxu0 0.0
    %543 = vmatprep.subr.mxu0 0.0
    %544 = vmatpush2.msra.mxu0 0.0
    %545 = vmatprep.subr.mxu0 0.0
    %546 = vmatpush2.msra.mxu0 0.0
    %547 = vmatprep.subr.mxu0 0.0
    %548 = vmatpush2.msra.mxu0 0.0
    %549 = vmatprep.subr.mxu0 0.0
    %550 = vmatpush2.msra.mxu0 0.0
    %551 = vmatprep.subr.mxu0 0.0
    %552 = vmatpush2.msra.mxu0 0.0
    %553 = vmatprep.subr.mxu0 0.0
    %554 = vmatpush2.msra.mxu0 0.0
    %555 = vmatprep.subr.mxu0 0.0
    %556 = vmatpush2.msra.mxu0 0.0
    %557 = vmatprep.subr.mxu0 0.0
    %558 = vmatpush2.msra.mxu0 0.0
    %559 = vmatprep.subr.mxu0 0.0
    %560 = vmatpush2.msra.mxu0 0.0
    %561 = vmatprep.subr.mxu0 0.0
    %562 = vmatpush2.msra.mxu0 0.0
    %563 = vmatprep.mubr.f32.mxu0 0.0
    %564 = vmatmul.mubr.f32.gmra.mxu0 %v477
    %v565 = vpop.f32.mrf.mxu0
    %v566 = vadd.f32 0.0, %v565
    %v567 = vpop.f32.mrf.mxu0
    %568 = vmatprep.mubr.f32.mxu0 0.0
    %569 = vmatmul.mubr.f32.gmra.mxu0 %v478
    %v570 = vpop.f32.mrf.mxu0
    %v571 = vadd.f32 0.0, %v570
    %v572 = vpop.f32.mrf.mxu0
    %573 = vmatprep.mubr.f32.mxu0 0.0
    %574 = vmatmul.mubr.f32.gmra.mxu0 %v479
    %v575 = vpop.f32.mrf.mxu0
    %v576 = vadd.f32 0.0, %v575
    %v577 = vpop.f32.mrf.mxu0
    %578 = vmatprep.mubr.f32.mxu0 0.0
    %579 = vmatmul.mubr.f32.gmra.mxu0 %v480
    %v580 = vpop.f32.mrf.mxu0
    %v581 = vadd.f32 0.0, %v580
    %v582 = vpop.f32.mrf.mxu0
    %583 = vmatprep.mubr.f32.mxu0 0.0
    %584 = vmatmul.mubr.f32.gmra.mxu0 %v481
    %v585 = vpop.f32.mrf.mxu0
    %v586 = vadd.f32 0.0, %v585
    %v587 = vpop.f32.mrf.mxu0
    %588 = vdwg.mxu0
    %589 = vmatprep.subr.mxu0 0.0
    %590 = vmatpush1.msra.mxu0 %v476
    %591 = vmatprep.subr.mxu0 0.0
    %592 = vmatpush1.msra.mxu0 %v475
    %593 = vmatprep.subr.mxu0 0.0
    %594 = vmatpush1.msra.mxu0 %v474
    %595 = vmatprep.subr.mxu0 0.0
    %596 = vmatpush1.msra.mxu0 %v473
    %597 = vmatprep.subr.mxu0 0.0
    %598 = vmatpush1.msra.mxu0 %v472
    %599 = vmatprep.subr.mxu0 0.0
    %600 = vmatpush1.msra.mxu0 %v471
    %601 = vmatprep.subr.mxu0 0.0
    %602 = vmatpush1.msra.mxu0 %v470
    %603 = vmatprep.subr.mxu0 0.0
    %604 = vmatpush1.msra.mxu0 %v469
    %605 = vmatprep.subr.mxu0 0.0
    %606 = vmatpush1.msra.mxu0 %v468
    %607 = vmatprep.subr.mxu0 0.0
    %608 = vmatpush1.msra.mxu0 %v467
    %609 = vmatprep.subr.mxu0 0.0
    %610 = vmatpush1.msra.mxu0 %v466
    %611 = vmatprep.subr.mxu0 0.0
    %612 = vmatpush1.msra.mxu0 %v465
    %613 = vmatprep.subr.mxu0 0.0
    %614 = vmatpush1.msra.mxu0 %v464
    %615 = vmatprep.subr.mxu0 0.0
    %616 = vmatpush1.msra.mxu0 %v463
    %617 = vmatprep.subr.mxu0 0.0
    %618 = vmatpush1.msra.mxu0 %v462
    %619 = vmatprep.subr.mxu0 0.0
    %620 = vmatpush1.msra.mxu0 %v461
    %621 = vmatprep.subr.mxu0 0.0
    %622 = vmatpush2.msra.mxu0 0.0
    %623 = vmatprep.subr.mxu0 0.0
    %624 = vmatpush2.msra.mxu0 0.0
    %625 = vmatprep.subr.mxu0 0.0
    %626 = vmatpush2.msra.mxu0 0.0
    %627 = vmatprep.subr.mxu0 0.0
    %628 = vmatpush2.msra.mxu0 0.0
    %629 = vmatprep.subr.mxu0 0.0
    %630 = vmatpush2.msra.mxu0 0.0
    %631 = vmatprep.subr.mxu0 0.0
    %632 = vmatpush2.msra.mxu0 0.0
    %633 = vmatprep.subr.mxu0 0.0
    %634 = vmatpush2.msra.mxu0 0.0
    %635 = vmatprep.subr.mxu0 0.0
    %636 = vmatpush2.msra.mxu0 0.0
    %637 = vmatprep.subr.mxu0 0.0
    %638 = vmatpush2.msra.mxu0 0.0
    %639 = vmatprep.subr.mxu0 0.0
    %640 = vmatpush2.msra.mxu0 0.0
    %641 = vmatprep.subr.mxu0 0.0
    %642 = vmatpush2.msra.mxu0 0.0
    %643 = vmatprep.subr.mxu0 0.0
    %644 = vmatpush2.msra.mxu0 0.0
    %645 = vmatprep.subr.mxu0 0.0
    %646 = vmatpush2.msra.mxu0 0.0
    %647 = vmatprep.subr.mxu0 0.0
    %648 = vmatpush2.msra.mxu0 0.0
    %649 = vmatprep.subr.mxu0 0.0
    %650 = vmatpush2.msra.mxu0 0.0
    %651 = vmatprep.subr.mxu0 0.0
    %652 = vmatpush2.msra.mxu0 0.0
    %653 = vmatprep.mubr.f32.mxu0 0.0
    %654 = vmatmul.mubr.f32.gmra.mxu0 %v456
    %v655 = vpop.f32.mrf.mxu0
    %v656 = vadd.f32 %v566, %v655
    %v657 = vpop.f32.mrf.mxu0
    %658 = vmatprep.mubr.f32.mxu0 0.0
    %659 = vmatmul.mubr.f32.gmra.mxu0 %v457
    %v660 = vpop.f32.mrf.mxu0
    %v661 = vadd.f32 %v571, %v660
    %v662 = vpop.f32.mrf.mxu0
    %663 = vmatprep.mubr.f32.mxu0 0.0
    %664 = vmatmul.mubr.f32.gmra.mxu0 %v458
    %v665 = vpop.f32.mrf.mxu0
    %v666 = vadd.f32 %v576, %v665
    %v667 = vpop.f32.mrf.mxu0
    %668 = vmatprep.mubr.f32.mxu0 0.0
    %669 = vmatmul.mubr.f32.gmra.mxu0 %v459
    %v670 = vpop.f32.mrf.mxu0
    %v671 = vadd.f32 %v581, %v670
    %v672 = vpop.f32.mrf.mxu0
    %673 = vmatprep.mubr.f32.mxu0 0.0
    %674 = vmatmul.mubr.f32.gmra.mxu0 %v460
    %v675 = vpop.f32.mrf.mxu0
    %v676 = vadd.f32 %v586, %v675
    %v677 = vpop.f32.mrf.mxu0
    %678 = vdwg.mxu0
    %v679 = vld [vmem:[#allocation2 + $0x2] sm:$0xff]
    %v680 = vld [vmem:[#allocation2 + $0xa] sm:$0xff]
    %v681 = vld [vmem:[#allocation2 + $0x12] sm:$0xff]
    %v682 = vld [vmem:[#allocation2 + $0x1a] sm:$0xff]
    %v683 = vld [vmem:[#allocation2 + $0x22] sm:$0x3]
    %s684 = scalar_lea.vmem [#allocation7], 256
    %v685 = vld [vmem:[%s684] sm:$0xff]
    %v686 = vld [vmem:[%s684 + $0x8] sm:$0xff]
    %v687 = vld [vmem:[%s684 + $0x10] sm:$0xff]
    %v688 = vld [vmem:[%s684 + $0x18] sm:$0xff]
    %v689 = vld [vmem:[%s684 + $0x20] sm:$0xff]
    %v690 = vld [vmem:[%s684 + $0x28] sm:$0xff]
    %v691 = vld [vmem:[%s684 + $0x30] sm:$0xff]
    %v692 = vld [vmem:[%s684 + $0x38] sm:$0xff]
    %v693 = vld [vmem:[%s684 + $0x40] sm:$0xff]
    %v694 = vld [vmem:[%s684 + $0x48] sm:$0xff]
    %v695 = vld [vmem:[%s684 + $0x50] sm:$0xff]
    %v696 = vld [vmem:[%s684 + $0x58] sm:$0xff]
    %v697 = vld [vmem:[%s684 + $0x60] sm:$0xff]
    %v698 = vld [vmem:[%s684 + $0x68] sm:$0xff]
    %v699 = vld [vmem:[%s684 + $0x70] sm:$0xff]
    %v700 = vld [vmem:[%s684 + $0x78] sm:$0xff]
    %701 = vmatprep.subr.mxu0 0.0
    %702 = vmatpush1.msra.mxu0 %v700
    %703 = vmatprep.subr.mxu0 0.0
    %704 = vmatpush1.msra.mxu0 %v699
    %705 = vmatprep.subr.mxu0 0.0
    %706 = vmatpush1.msra.mxu0 %v698
    %707 = vmatprep.subr.mxu0 0.0
    %708 = vmatpush1.msra.mxu0 %v697
    %709 = vmatprep.subr.mxu0 0.0
    %710 = vmatpush1.msra.mxu0 %v696
    %711 = vmatprep.subr.mxu0 0.0
    %712 = vmatpush1.msra.mxu0 %v695
    %713 = vmatprep.subr.mxu0 0.0
    %714 = vmatpush1.msra.mxu0 %v694
    %715 = vmatprep.subr.mxu0 0.0
    %716 = vmatpush1.msra.mxu0 %v693
    %717 = vmatprep.subr.mxu0 0.0
    %718 = vmatpush1.msra.mxu0 %v692
    %719 = vmatprep.subr.mxu0 0.0
    %720 = vmatpush1.msra.mxu0 %v691
    %721 = vmatprep.subr.mxu0 0.0
    %722 = vmatpush1.msra.mxu0 %v690
    %723 = vmatprep.subr.mxu0 0.0
    %724 = vmatpush1.msra.mxu0 %v689
    %725 = vmatprep.subr.mxu0 0.0
    %726 = vmatpush1.msra.mxu0 %v688
    %727 = vmatprep.subr.mxu0 0.0
    %728 = vmatpush1.msra.mxu0 %v687
    %729 = vmatprep.subr.mxu0 0.0
    %730 = vmatpush1.msra.mxu0 %v686
    %731 = vmatprep.subr.mxu0 0.0
    %732 = vmatpush1.msra.mxu0 %v685
    %733 = vmatprep.subr.mxu0 0.0
    %734 = vmatpush2.msra.mxu0 0.0
    %735 = vmatprep.subr.mxu0 0.0
    %736 = vmatpush2.msra.mxu0 0.0
    %737 = vmatprep.subr.mxu0 0.0
    %738 = vmatpush2.msra.mxu0 0.0
    %739 = vmatprep.subr.mxu0 0.0
    %740 = vmatpush2.msra.mxu0 0.0
    %741 = vmatprep.subr.mxu0 0.0
    %742 = vmatpush2.msra.mxu0 0.0
    %743 = vmatprep.subr.mxu0 0.0
    %744 = vmatpush2.msra.mxu0 0.0
    %745 = vmatprep.subr.mxu0 0.0
    %746 = vmatpush2.msra.mxu0 0.0
    %747 = vmatprep.subr.mxu0 0.0
    %748 = vmatpush2.msra.mxu0 0.0
    %749 = vmatprep.subr.mxu0 0.0
    %750 = vmatpush2.msra.mxu0 0.0
    %751 = vmatprep.subr.mxu0 0.0
    %752 = vmatpush2.msra.mxu0 0.0
    %753 = vmatprep.subr.mxu0 0.0
    %754 = vmatpush2.msra.mxu0 0.0
    %755 = vmatprep.subr.mxu0 0.0
    %756 = vmatpush2.msra.mxu0 0.0
    %757 = vmatprep.subr.mxu0 0.0
    %758 = vmatpush2.msra.mxu0 0.0
    %759 = vmatprep.subr.mxu0 0.0
    %760 = vmatpush2.msra.mxu0 0.0
    %761 = vmatprep.subr.mxu0 0.0
    %762 = vmatpush2.msra.mxu0 0.0
    %763 = vmatprep.subr.mxu0 0.0
    %764 = vmatpush2.msra.mxu0 0.0
    %765 = vmatprep.mubr.f32.mxu0 0.0
    %766 = vmatmul.mubr.f32.gmra.mxu0 %v679
    %v767 = vpop.f32.mrf.mxu0
    %v768 = vadd.f32 0.0, %v767
    %v769 = vpop.f32.mrf.mxu0
    %770 = vmatprep.mubr.f32.mxu0 0.0
    %771 = vmatmul.mubr.f32.gmra.mxu0 %v680
    %v772 = vpop.f32.mrf.mxu0
    %v773 = vadd.f32 0.0, %v772
    %v774 = vpop.f32.mrf.mxu0
    %775 = vmatprep.mubr.f32.mxu0 0.0
    %776 = vmatmul.mubr.f32.gmra.mxu0 %v681
    %v777 = vpop.f32.mrf.mxu0
    %v778 = vadd.f32 0.0, %v777
    %v779 = vpop.f32.mrf.mxu0
    %780 = vmatprep.mubr.f32.mxu0 0.0
    %781 = vmatmul.mubr.f32.gmra.mxu0 %v682
    %v782 = vpop.f32.mrf.mxu0
    %v783 = vadd.f32 0.0, %v782
    %v784 = vpop.f32.mrf.mxu0
    %785 = vmatprep.mubr.f32.mxu0 0.0
    %786 = vmatmul.mubr.f32.gmra.mxu0 %v683
    %v787 = vpop.f32.mrf.mxu0
    %v788 = vadd.f32 0.0, %v787
    %v789 = vpop.f32.mrf.mxu0
    %790 = vdwg.mxu0
    %v791 = vadd.f32 %v656, %v768
    %v792 = vadd.f32 %v661, %v773
    %v793 = vadd.f32 %v666, %v778
    %v794 = vadd.f32 %v671, %v783
    %v795 = vadd.f32 %v676, %v788
    %v796 = vld [vmem:[%s4] sm:$0x1]
    %v798 = vlaneseq
    %v799 = vshrl.u32 %v798, 7
    %v800 = vsub.s32 0, %v799
    %v801 = vrot.slane %v796, %v800
    %v803 = vadd.f32 %v791, %v801
    %v804 = vadd.f32 %v792, %v801
    %v805 = vadd.f32 %v793, %v801
    %v806 = vadd.f32 %v794, %v801
    %v807 = vadd.f32 %v795, %v801
    %v808 = vmax.f32 %v803, 0.0
    %v809 = vmax.f32 %v804, 0.0
    %v810 = vmax.f32 %v805, 0.0
    %v811 = vmax.f32 %v806, 0.0
    %v812 = vmax.f32 %v807, 0.0
    %813 = vst [vmem:[#allocation3 + $0x1] sm:$0xff] %v808
    %814 = vst [vmem:[#allocation3 + $0x9] sm:$0xff] %v809
    %815 = vst [vmem:[#allocation3 + $0x11] sm:$0xff] %v810
    %816 = vst [vmem:[#allocation3 + $0x19] sm:$0xff] %v811
    %817 = vst [vmem:[#allocation3 + $0x21] sm:$0x3] %v812
    %818 = vst [vmem:[#allocation3] sm:$0x1] 0.0
    %819 = vst [vmem:[#allocation3 + $0x11] sm:$0x1] 0.0
    %820 = vst [vmem:[#allocation3 + $0x12] sm:$0x1] 0.0
    %821 = vst [vmem:[#allocation3 + $0x23] sm:$0x1] 0.0
    %v822 = vld [vmem:[#allocation3] sm:$0xff]
    %v823 = vld [vmem:[#allocation3 + $0x8] sm:$0xff]
    %v824 = vld [vmem:[#allocation3 + $0x10] sm:$0xff]
    %v825 = vld [vmem:[#allocation3 + $0x18] sm:$0xff]
    %v826 = vld [vmem:[#allocation3 + $0x20] sm:$0x3]
    %v827 = vld [vmem:[#allocation9] sm:$0xff]
    %v828 = vld [vmem:[#allocation9 + $0x8] sm:$0xff]
    %v829 = vld [vmem:[#allocation9 + $0x10] sm:$0xff]
    %v830 = vld [vmem:[#allocation9 + $0x18] sm:$0xff]
    %v831 = vld [vmem:[#allocation9 + $0x20] sm:$0xff]
    %v832 = vld [vmem:[#allocation9 + $0x28] sm:$0xff]
    %v833 = vld [vmem:[#allocation9 + $0x30] sm:$0xff]
    %v834 = vld [vmem:[#allocation9 + $0x38] sm:$0xff]
    %v835 = vld [vmem:[#allocation9 + $0x40] sm:$0xff]
    %v836 = vld [vmem:[#allocation9 + $0x48] sm:$0xff]
    %v837 = vld [vmem:[#allocation9 + $0x50] sm:$0xff]
    %v838 = vld [vmem:[#allocation9 + $0x58] sm:$0xff]
    %v839 = vld [vmem:[#allocation9 + $0x60] sm:$0xff]
    %v840 = vld [vmem:[#allocation9 + $0x68] sm:$0xff]
    %v841 = vld [vmem:[#allocation9 + $0x70] sm:$0xff]
    %v842 = vld [vmem:[#allocation9 + $0x78] sm:$0xff]
    %v843 = vld [vmem:[#allocation3 + $0x1] sm:$0xff]
    %v844 = vld [vmem:[#allocation3 + $0x9] sm:$0xff]
    %v845 = vld [vmem:[#allocation3 + $0x11] sm:$0xff]
    %v846 = vld [vmem:[#allocation3 + $0x19] sm:$0xff]
    %v847 = vld [vmem:[#allocation3 + $0x21] sm:$0x3]
    %s848 = scalar_lea.vmem [#allocation9], 128
    %v849 = vld [vmem:[%s848] sm:$0xff]
    %v850 = vld [vmem:[%s848 + $0x8] sm:$0xff]
    %v851 = vld [vmem:[%s848 + $0x10] sm:$0xff]
    %v852 = vld [vmem:[%s848 + $0x18] sm:$0xff]
    %v853 = vld [vmem:[%s848 + $0x20] sm:$0xff]
    %v854 = vld [vmem:[%s848 + $0x28] sm:$0xff]
    %v855 = vld [vmem:[%s848 + $0x30] sm:$0xff]
    %v856 = vld [vmem:[%s848 + $0x38] sm:$0xff]
    %v857 = vld [vmem:[%s848 + $0x40] sm:$0xff]
    %v858 = vld [vmem:[%s848 + $0x48] sm:$0xff]
    %v859 = vld [vmem:[%s848 + $0x50] sm:$0xff]
    %v860 = vld [vmem:[%s848 + $0x58] sm:$0xff]
    %v861 = vld [vmem:[%s848 + $0x60] sm:$0xff]
    %v862 = vld [vmem:[%s848 + $0x68] sm:$0xff]
    %v863 = vld [vmem:[%s848 + $0x70] sm:$0xff]
    %v864 = vld [vmem:[%s848 + $0x78] sm:$0xff]
    %865 = vmatprep.subr.mxu0 0.0
    %866 = vmatpush1.msra.mxu0 %v864
    %867 = vmatprep.subr.mxu0 0.0
    %868 = vmatpush1.msra.mxu0 %v863
    %869 = vmatprep.subr.mxu0 0.0
    %870 = vmatpush1.msra.mxu0 %v862
    %871 = vmatprep.subr.mxu0 0.0
    %872 = vmatpush1.msra.mxu0 %v861
    %873 = vmatprep.subr.mxu0 0.0
    %874 = vmatpush1.msra.mxu0 %v860
    %875 = vmatprep.subr.mxu0 0.0
    %876 = vmatpush1.msra.mxu0 %v859
    %877 = vmatprep.subr.mxu0 0.0
    %878 = vmatpush1.msra.mxu0 %v858
    %879 = vmatprep.subr.mxu0 0.0
    %880 = vmatpush1.msra.mxu0 %v857
    %881 = vmatprep.subr.mxu0 0.0
    %882 = vmatpush1.msra.mxu0 %v856
    %883 = vmatprep.subr.mxu0 0.0
    %884 = vmatpush1.msra.mxu0 %v855
    %885 = vmatprep.subr.mxu0 0.0
    %886 = vmatpush1.msra.mxu0 %v854
    %887 = vmatprep.subr.mxu0 0.0
    %888 = vmatpush1.msra.mxu0 %v853
    %889 = vmatprep.subr.mxu0 0.0
    %890 = vmatpush1.msra.mxu0 %v852
    %891 = vmatprep.subr.mxu0 0.0
    %892 = vmatpush1.msra.mxu0 %v851
    %893 = vmatprep.subr.mxu0 0.0
    %894 = vmatpush1.msra.mxu0 %v850
    %895 = vmatprep.subr.mxu0 0.0
    %896 = vmatpush1.msra.mxu0 %v849
    %897 = vmatprep.subr.mxu0 0.0
    %898 = vmatpush2.msra.mxu0 0.0
    %899 = vmatprep.subr.mxu0 0.0
    %900 = vmatpush2.msra.mxu0 0.0
    %901 = vmatprep.subr.mxu0 0.0
    %902 = vmatpush2.msra.mxu0 0.0
    %903 = vmatprep.subr.mxu0 0.0
    %904 = vmatpush2.msra.mxu0 0.0
    %905 = vmatprep.subr.mxu0 0.0
    %906 = vmatpush2.msra.mxu0 0.0
    %907 = vmatprep.subr.mxu0 0.0
    %908 = vmatpush2.msra.mxu0 0.0
    %909 = vmatprep.subr.mxu0 0.0
    %910 = vmatpush2.msra.mxu0 0.0
    %911 = vmatprep.subr.mxu0 0.0
    %912 = vmatpush2.msra.mxu0 0.0
    %913 = vmatprep.subr.mxu0 0.0
    %914 = vmatpush2.msra.mxu0 0.0
    %915 = vmatprep.subr.mxu0 0.0
    %916 = vmatpush2.msra.mxu0 0.0
    %917 = vmatprep.subr.mxu0 0.0
    %918 = vmatpush2.msra.mxu0 0.0
    %919 = vmatprep.subr.mxu0 0.0
    %920 = vmatpush2.msra.mxu0 0.0
    %921 = vmatprep.subr.mxu0 0.0
    %922 = vmatpush2.msra.mxu0 0.0
    %923 = vmatprep.subr.mxu0 0.0
    %924 = vmatpush2.msra.mxu0 0.0
    %925 = vmatprep.subr.mxu0 0.0
    %926 = vmatpush2.msra.mxu0 0.0
    %927 = vmatprep.subr.mxu0 0.0
    %928 = vmatpush2.msra.mxu0 0.0
    %929 = vmatprep.mubr.f32.mxu0 0.0
    %930 = vmatmul.mubr.f32.gmra.mxu0 %v843
    %v931 = vpop.f32.mrf.mxu0
    %v932 = vadd.f32 0.0, %v931
    %v933 = vpop.f32.mrf.mxu0
    %934 = vmatprep.mubr.f32.mxu0 0.0
    %935 = vmatmul.mubr.f32.gmra.mxu0 %v844
    %v936 = vpop.f32.mrf.mxu0
    %v937 = vadd.f32 0.0, %v936
    %v938 = vpop.f32.mrf.mxu0
    %939 = vmatprep.mubr.f32.mxu0 0.0
    %940 = vmatmul.mubr.f32.gmra.mxu0 %v845
    %v941 = vpop.f32.mrf.mxu0
    %v942 = vadd.f32 0.0, %v941
    %v943 = vpop.f32.mrf.mxu0
    %944 = vmatprep.mubr.f32.mxu0 0.0
    %945 = vmatmul.mubr.f32.gmra.mxu0 %v846
    %v946 = vpop.f32.mrf.mxu0
    %v947 = vadd.f32 0.0, %v946
    %v948 = vpop.f32.mrf.mxu0
    %949 = vmatprep.mubr.f32.mxu0 0.0
    %950 = vmatmul.mubr.f32.gmra.mxu0 %v847
    %v951 = vpop.f32.mrf.mxu0
    %v952 = vadd.f32 0.0, %v951
    %v953 = vpop.f32.mrf.mxu0
    %954 = vdwg.mxu0
    %955 = vmatprep.subr.mxu0 0.0
    %956 = vmatpush1.msra.mxu0 %v842
    %957 = vmatprep.subr.mxu0 0.0
    %958 = vmatpush1.msra.mxu0 %v841
    %959 = vmatprep.subr.mxu0 0.0
    %960 = vmatpush1.msra.mxu0 %v840
    %961 = vmatprep.subr.mxu0 0.0
    %962 = vmatpush1.msra.mxu0 %v839
    %963 = vmatprep.subr.mxu0 0.0
    %964 = vmatpush1.msra.mxu0 %v838
    %965 = vmatprep.subr.mxu0 0.0
    %966 = vmatpush1.msra.mxu0 %v837
    %967 = vmatprep.subr.mxu0 0.0
    %968 = vmatpush1.msra.mxu0 %v836
    %969 = vmatprep.subr.mxu0 0.0
    %970 = vmatpush1.msra.mxu0 %v835
    %971 = vmatprep.subr.mxu0 0.0
    %972 = vmatpush1.msra.mxu0 %v834
    %973 = vmatprep.subr.mxu0 0.0
    %974 = vmatpush1.msra.mxu0 %v833
    %975 = vmatprep.subr.mxu0 0.0
    %976 = vmatpush1.msra.mxu0 %v832
    %977 = vmatprep.subr.mxu0 0.0
    %978 = vmatpush1.msra.mxu0 %v831
    %979 = vmatprep.subr.mxu0 0.0
    %980 = vmatpush1.msra.mxu0 %v830
    %981 = vmatprep.subr.mxu0 0.0
    %982 = vmatpush1.msra.mxu0 %v829
    %983 = vmatprep.subr.mxu0 0.0
    %984 = vmatpush1.msra.mxu0 %v828
    %985 = vmatprep.subr.mxu0 0.0
    %986 = vmatpush1.msra.mxu0 %v827
    %987 = vmatprep.subr.mxu0 0.0
    %988 = vmatpush2.msra.mxu0 0.0
    %989 = vmatprep.subr.mxu0 0.0
    %990 = vmatpush2.msra.mxu0 0.0
    %991 = vmatprep.subr.mxu0 0.0
    %992 = vmatpush2.msra.mxu0 0.0
    %993 = vmatprep.subr.mxu0 0.0
    %994 = vmatpush2.msra.mxu0 0.0
    %995 = vmatprep.subr.mxu0 0.0
    %996 = vmatpush2.msra.mxu0 0.0
    %997 = vmatprep.subr.mxu0 0.0
    %998 = vmatpush2.msra.mxu0 0.0
    %999 = vmatprep.subr.mxu0 0.0
    %1000 = vmatpush2.msra.mxu0 0.0
    %1001 = vmatprep.subr.mxu0 0.0
    %1002 = vmatpush2.msra.mxu0 0.0
    %1003 = vmatprep.subr.mxu0 0.0
    %1004 = vmatpush2.msra.mxu0 0.0
    %1005 = vmatprep.subr.mxu0 0.0
    %1006 = vmatpush2.msra.mxu0 0.0
    %1007 = vmatprep.subr.mxu0 0.0
    %1008 = vmatpush2.msra.mxu0 0.0
    %1009 = vmatprep.subr.mxu0 0.0
    %1010 = vmatpush2.msra.mxu0 0.0
    %1011 = vmatprep.subr.mxu0 0.0
    %1012 = vmatpush2.msra.mxu0 0.0
    %1013 = vmatprep.subr.mxu0 0.0
    %1014 = vmatpush2.msra.mxu0 0.0
    %1015 = vmatprep.subr.mxu0 0.0
    %1016 = vmatpush2.msra.mxu0 0.0
    %1017 = vmatprep.subr.mxu0 0.0
    %1018 = vmatpush2.msra.mxu0 0.0
    %1019 = vmatprep.mubr.f32.mxu0 0.0
    %1020 = vmatmul.mubr.f32.gmra.mxu0 %v822
    %v1021 = vpop.f32.mrf.mxu0
    %v1022 = vadd.f32 %v932, %v1021
    %v1023 = vpop.f32.mrf.mxu0
    %1024 = vmatprep.mubr.f32.mxu0 0.0
    %1025 = vmatmul.mubr.f32.gmra.mxu0 %v823
    %v1026 = vpop.f32.mrf.mxu0
    %v1027 = vadd.f32 %v937, %v1026
    %v1028 = vpop.f32.mrf.mxu0
    %1029 = vmatprep.mubr.f32.mxu0 0.0
    %1030 = vmatmul.mubr.f32.gmra.mxu0 %v824
    %v1031 = vpop.f32.mrf.mxu0
    %v1032 = vadd.f32 %v942, %v1031
    %v1033 = vpop.f32.mrf.mxu0
    %1034 = vmatprep.mubr.f32.mxu0 0.0
    %1035 = vmatmul.mubr.f32.gmra.mxu0 %v825
    %v1036 = vpop.f32.mrf.mxu0
    %v1037 = vadd.f32 %v947, %v1036
    %v1038 = vpop.f32.mrf.mxu0
    %1039 = vmatprep.mubr.f32.mxu0 0.0
    %1040 = vmatmul.mubr.f32.gmra.mxu0 %v826
    %v1041 = vpop.f32.mrf.mxu0
    %v1042 = vadd.f32 %v952, %v1041
    %v1043 = vpop.f32.mrf.mxu0
    %1044 = vdwg.mxu0
    %v1045 = vld [vmem:[#allocation3 + $0x2] sm:$0xff]
    %v1046 = vld [vmem:[#allocation3 + $0xa] sm:$0xff]
    %v1047 = vld [vmem:[#allocation3 + $0x12] sm:$0xff]
    %v1048 = vld [vmem:[#allocation3 + $0x1a] sm:$0xff]
    %v1049 = vld [vmem:[#allocation3 + $0x22] sm:$0x3]
    %s1050 = scalar_lea.vmem [#allocation9], 256
    %v1051 = vld [vmem:[%s1050] sm:$0xff]
    %v1052 = vld [vmem:[%s1050 + $0x8] sm:$0xff]
    %v1053 = vld [vmem:[%s1050 + $0x10] sm:$0xff]
    %v1054 = vld [vmem:[%s1050 + $0x18] sm:$0xff]
    %v1055 = vld [vmem:[%s1050 + $0x20] sm:$0xff]
    %v1056 = vld [vmem:[%s1050 + $0x28] sm:$0xff]
    %v1057 = vld [vmem:[%s1050 + $0x30] sm:$0xff]
    %v1058 = vld [vmem:[%s1050 + $0x38] sm:$0xff]
    %v1059 = vld [vmem:[%s1050 + $0x40] sm:$0xff]
    %v1060 = vld [vmem:[%s1050 + $0x48] sm:$0xff]
    %v1061 = vld [vmem:[%s1050 + $0x50] sm:$0xff]
    %v1062 = vld [vmem:[%s1050 + $0x58] sm:$0xff]
    %v1063 = vld [vmem:[%s1050 + $0x60] sm:$0xff]
    %v1064 = vld [vmem:[%s1050 + $0x68] sm:$0xff]
    %v1065 = vld [vmem:[%s1050 + $0x70] sm:$0xff]
    %v1066 = vld [vmem:[%s1050 + $0x78] sm:$0xff]
    %1067 = vmatprep.subr.mxu0 0.0
    %1068 = vmatpush1.msra.mxu0 %v1066
    %1069 = vmatprep.subr.mxu0 0.0
    %1070 = vmatpush1.msra.mxu0 %v1065
    %1071 = vmatprep.subr.mxu0 0.0
    %1072 = vmatpush1.msra.mxu0 %v1064
    %1073 = vmatprep.subr.mxu0 0.0
    %1074 = vmatpush1.msra.mxu0 %v1063
    %1075 = vmatprep.subr.mxu0 0.0
    %1076 = vmatpush1.msra.mxu0 %v1062
    %1077 = vmatprep.subr.mxu0 0.0
    %1078 = vmatpush1.msra.mxu0 %v1061
    %1079 = vmatprep.subr.mxu0 0.0
    %1080 = vmatpush1.msra.mxu0 %v1060
    %1081 = vmatprep.subr.mxu0 0.0
    %1082 = vmatpush1.msra.mxu0 %v1059
    %1083 = vmatprep.subr.mxu0 0.0
    %1084 = vmatpush1.msra.mxu0 %v1058
    %1085 = vmatprep.subr.mxu0 0.0
    %1086 = vmatpush1.msra.mxu0 %v1057
    %1087 = vmatprep.subr.mxu0 0.0
    %1088 = vmatpush1.msra.mxu0 %v1056
    %1089 = vmatprep.subr.mxu0 0.0
    %1090 = vmatpush1.msra.mxu0 %v1055
    %1091 = vmatprep.subr.mxu0 0.0
    %1092 = vmatpush1.msra.mxu0 %v1054
    %1093 = vmatprep.subr.mxu0 0.0
    %1094 = vmatpush1.msra.mxu0 %v1053
    %1095 = vmatprep.subr.mxu0 0.0
    %1096 = vmatpush1.msra.mxu0 %v1052
    %1097 = vmatprep.subr.mxu0 0.0
    %1098 = vmatpush1.msra.mxu0 %v1051
    %1099 = vmatprep.subr.mxu0 0.0
    %1100 = vmatpush2.msra.mxu0 0.0
    %1101 = vmatprep.subr.mxu0 0.0
    %1102 = vmatpush2.msra.mxu0 0.0
    %1103 = vmatprep.subr.mxu0 0.0
    %1104 = vmatpush2.msra.mxu0 0.0
    %1105 = vmatprep.subr.mxu0 0.0
    %1106 = vmatpush2.msra.mxu0 0.0
    %1107 = vmatprep.subr.mxu0 0.0
    %1108 = vmatpush2.msra.mxu0 0.0
    %1109 = vmatprep.subr.mxu0 0.0
    %1110 = vmatpush2.msra.mxu0 0.0
    %1111 = vmatprep.subr.mxu0 0.0
    %1112 = vmatpush2.msra.mxu0 0.0
    %1113 = vmatprep.subr.mxu0 0.0
    %1114 = vmatpush2.msra.mxu0 0.0
    %1115 = vmatprep.subr.mxu0 0.0
    %1116 = vmatpush2.msra.mxu0 0.0
    %1117 = vmatprep.subr.mxu0 0.0
    %1118 = vmatpush2.msra.mxu0 0.0
    %1119 = vmatprep.subr.mxu0 0.0
    %1120 = vmatpush2.msra.mxu0 0.0
    %1121 = vmatprep.subr.mxu0 0.0
    %1122 = vmatpush2.msra.mxu0 0.0
    %1123 = vmatprep.subr.mxu0 0.0
    %1124 = vmatpush2.msra.mxu0 0.0
    %1125 = vmatprep.subr.mxu0 0.0
    %1126 = vmatpush2.msra.mxu0 0.0
    %1127 = vmatprep.subr.mxu0 0.0
    %1128 = vmatpush2.msra.mxu0 0.0
    %1129 = vmatprep.subr.mxu0 0.0
    %1130 = vmatpush2.msra.mxu0 0.0
    %1131 = vmatprep.mubr.f32.mxu0 0.0
    %1132 = vmatmul.mubr.f32.gmra.mxu0 %v1045
    %v1133 = vpop.f32.mrf.mxu0
    %v1134 = vadd.f32 0.0, %v1133
    %v1135 = vpop.f32.mrf.mxu0
    %1136 = vmatprep.mubr.f32.mxu0 0.0
    %1137 = vmatmul.mubr.f32.gmra.mxu0 %v1046
    %v1138 = vpop.f32.mrf.mxu0
    %v1139 = vadd.f32 0.0, %v1138
    %v1140 = vpop.f32.mrf.mxu0
    %1141 = vmatprep.mubr.f32.mxu0 0.0
    %1142 = vmatmul.mubr.f32.gmra.mxu0 %v1047
    %v1143 = vpop.f32.mrf.mxu0
    %v1144 = vadd.f32 0.0, %v1143
    %v1145 = vpop.f32.mrf.mxu0
    %1146 = vmatprep.mubr.f32.mxu0 0.0
    %1147 = vmatmul.mubr.f32.gmra.mxu0 %v1048
    %v1148 = vpop.f32.mrf.mxu0
    %v1149 = vadd.f32 0.0, %v1148
    %v1150 = vpop.f32.mrf.mxu0
    %1151 = vmatprep.mubr.f32.mxu0 0.0
    %1152 = vmatmul.mubr.f32.gmra.mxu0 %v1049
    %v1153 = vpop.f32.mrf.mxu0
    %v1154 = vadd.f32 0.0, %v1153
    %v1155 = vpop.f32.mrf.mxu0
    %1156 = vdwg.mxu0
    %v1157 = vadd.f32 %v1022, %v1134
    %v1158 = vadd.f32 %v1027, %v1139
    %v1159 = vadd.f32 %v1032, %v1144
    %v1160 = vadd.f32 %v1037, %v1149
    %v1161 = vadd.f32 %v1042, %v1154
    %v1162 = vld [vmem:[%s6] sm:$0x1]
    %v1164 = vlaneseq
    %v1165 = vshrl.u32 %v1164, 7
    %v1166 = vsub.s32 0, %v1165
    %v1167 = vrot.slane %v1162, %v1166
    %v1169 = vadd.f32 %v1157, %v1167
    %v1170 = vadd.f32 %v1158, %v1167
    %v1171 = vadd.f32 %v1159, %v1167
    %v1172 = vadd.f32 %v1160, %v1167
    %v1173 = vadd.f32 %v1161, %v1167
    %1174 = vst [vmem:[#allocation10] sm:$0xff] %v1169
    %1175 = vst [vmem:[#allocation10 + $0x8] sm:$0xff] %v1170
    %1176 = vst [vmem:[#allocation10 + $0xe] sm:$0xfc] %v1171
    %1177 = vst [vmem:[#allocation10 + $0x16] sm:$0xff] %v1172
    %1178 = vst [vmem:[#allocation10 + $0x1e] sm:$0x3] %v1173
    // Predicated region
    $region42: #{tpu_custom_call.1} parent=1 // pred_check
      _
    $region43: #{tpu_custom_call.1} parent=1 // pred_check_branch
      %1180 = sbr.rel (0) target = $region45
    $region44: #{tpu_custom_call.1} parent=1 // pred_region
      %s1182 = ssub.s32 512, 512
      %1183 = vsyncadd [#allocation6], %s1182
      %s1184 = sshll.u32 [#allocation10], 4
      %s1185 = int_to_ptr.vmem [resolvable:$true] %s1184
      %1190 = dma.vmem_to_hbm [thread:$0]  %s1185, 512, %s7, [#allocation6], 128, 128, 8
    $region45: #{tpu_custom_call.1} parent=1 // pred_fallthru
      _
    // Predicated region
    $region46: #{tpu_custom_call.1} parent=1 // pred_check
      _
    $region47: #{tpu_custom_call.1} parent=1 // pred_check_branch
      %1192 = sbr.rel (0) target = $region49
    $region48: #{tpu_custom_call.1} parent=1 // pred_region
      %1193 = dma.done [#allocation6], 512
    $region49: #{tpu_custom_call.1} parent=1 // pred_fallthru
      _
    %1194 = vsyncpa [#allocation5], 1
    %1195 = vsyncpa [#allocation8], 1
    %1196 = vsyncpa [#allocation6], 1

</llo_original>
